<compile_context>
chip_gen: v5e
topology: v5e:2x2
jax: 0.10.0
libtpu: 0.0.40
codegen_flags: <defaults>
</compile_context>

<pallas_src>
import math

import jax
import jax.numpy as jnp
from jax import lax
from jax.experimental import pallas as pl
from jax.experimental.pallas import tpu as pltpu

# ---------------- small synthetic config ----------------
B = 2            # batch
C = 3            # input channels
T = 4            # num frames
IMG = 16         # spatial crop size
P = 8            # patch size
D = 32           # num_features
HEADS = 4
DH = D // HEADS
DEPTH = 2
MLP = 4 * D
HP = IMG // P
N = T * HP * HP  # number of tokens (tubelet_size = 1, no cls token)
BN = B * N       # batch folded into rows for all dense matmuls
K = C * P * P    # flattened patch dim
EPS = 1e-6


# ---------------- in-kernel helpers ----------------
def _layer_norm(x, g, b):
    mu = jnp.mean(x, axis=-1, keepdims=True)
    var = jnp.mean((x - mu) ** 2, axis=-1, keepdims=True)
    return (x - mu) * lax.rsqrt(var + EPS) * g + b


def _gelu(x):
    # TODO(synk): tanh-approx GELU; PyTorch nn.GELU default is exact erf GELU
    # (expect ~1e-3-level deviation).
    return 0.5 * x * (1.0 + jnp.tanh(0.7978845608028654 * (x + 0.044715 * x * x * x)))


# ---------------- fused kernel: stem + DEPTH blocks + head ----------------
def fused_kernel(xp_ref, stem_w_ref, stem_b_ref, pos_ref,
                 wqkv_ref, bqkv_ref, wproj_ref, bproj_ref,
                 ln1g_ref, ln1b_ref, ln2g_ref, ln2b_ref,
                 w1_ref, b1_ref, w2_ref, b2_ref,
                 normg_ref, normb_ref,
                 o_ref, tok_ref):
    d = pl.program_id(0)
    last = pl.num_programs(0) - 1

    # ---- stem (patch matmul) + learnable pos_embed, first depth step only ----
    @pl.when(d == 0)
    def _():
        pe = jnp.dot(xp_ref[...], stem_w_ref[...],
                     preferred_element_type=jnp.float32) + stem_b_ref[...]
        pos = jnp.broadcast_to(pos_ref[...][None], (B, N, D)).reshape(BN, D)
        tok_ref[...] = pe + pos

    # ---- one pre-norm transformer block (weights of depth step d, read
    #      from the resident depth-stacked VMEM slabs) ----
    x = tok_ref[...]                                            # (BN, D) f32

    # multi-head self attention: one fused QKV matmul, per-head slices for the
    # attention dots, head-concat, one output-projection matmul.
    h1 = _layer_norm(x, ln1g_ref[d], ln1b_ref[d])
    qkv = jnp.dot(h1, wqkv_ref[d], preferred_element_type=jnp.float32) + bqkv_ref[d]
    qkv = qkv.reshape(B, N, 3 * D)                              # (B, N, 3D)

    av_parts = []
    for h in range(HEADS):                                      # static unroll
        q_h = qkv[:, :, h * DH:(h + 1) * DH]        # 1/sqrt(DH) folded in wq/bq
        k_h = qkv[:, :, D + h * DH:D + (h + 1) * DH]
        v_h = qkv[:, :, 2 * D + h * DH:2 * D + (h + 1) * DH]
        s = lax.dot_general(q_h, k_h, (((2,), (2,)), ((0,), (0,))),
                            preferred_element_type=jnp.float32)  # (B, N, N)
        s = s - jnp.max(s, axis=-1, keepdims=True)
        e = jnp.exp(s)
        # approx reciprocal on the EUP slot (deliberate; ~1e-4 rel. error vs
        # torch.softmax) -- keeps the VALU free.
        p = e * pl.reciprocal(jnp.sum(e, axis=-1, keepdims=True), approx=True)
        av_parts.append(lax.dot_general(p, v_h, (((2,), (1,)), ((0,), (0,))),
                                        preferred_element_type=jnp.float32))
    av = jnp.concatenate(av_parts, axis=-1).reshape(BN, D)      # concat heads

    attn = jnp.dot(av, wproj_ref[d],
                   preferred_element_type=jnp.float32) + bproj_ref[d]
    x = x + attn                                                # residual (drop_path = id)

    # MLP (folded-batch, lane-dense matmuls)
    h2 = _layer_norm(x, ln2g_ref[d], ln2b_ref[d])
    m = _gelu(jnp.dot(h2, w1_ref[d], preferred_element_type=jnp.float32) + b1_ref[d])
    y = jnp.dot(m, w2_ref[d], preferred_element_type=jnp.float32) + b2_ref[d]
    tok_ref[...] = x + y                                        # residual (drop_path = id)

    # ---- final LayerNorm + mean over tokens, last depth step only ----
    @pl.when(d == last)
    def _():
        z = _layer_norm(tok_ref[...], normg_ref[...], normb_ref[...])   # (BN, D)
        o_ref[...] = jnp.mean(z.reshape(B, N, D), axis=1)               # (B, D)


# ---------------- pallas_call wrapper ----------------
def _resident_spec(a):
    # Full-array block with a constant index map: DMA'd once, resident in VMEM
    # across all depth steps (kernel slices the depth axis in-VMEM via ref[d]).
    nd = a.ndim
    return pl.BlockSpec(a.shape, lambda d, _nd=nd: (0,) * _nd)


def fused_forward(xp, pk):
    args = (xp, pk["stem_w"], pk["stem_b"], pk["pos"],
            pk["wqkv"], pk["bqkv"], pk["wproj"], pk["bproj"],
            pk["ln1g"], pk["ln1b"], pk["ln2g"], pk["ln2b"],
            pk["w1"], pk["b1"], pk["w2"], pk["b2"],
            pk["normg"], pk["normb"])
    return pl.pallas_call(
        fused_kernel,
        out_shape=jax.ShapeDtypeStruct((B, D), jnp.float32),
        grid_spec=pltpu.PrefetchScalarGridSpec(
            num_scalar_prefetch=0,
            grid=(DEPTH,),
            in_specs=[_resident_spec(a) for a in args],
            out_specs=pl.BlockSpec((B, D), lambda d: (0, 0)),
            scratch_shapes=[pltpu.VMEM((BN, D), jnp.float32)]),
        compiler_params=pltpu.CompilerParams(dimension_semantics=("arbitrary",)),
    )(*args)


# ---------------- parameter init (module-like layout) ----------------
def init_params(key):
    keys = iter(jax.random.split(key, 4 + DEPTH * 8))

    def nrm(shape, std):
        return jax.random.normal(next(keys), shape, jnp.float32) * std

    blocks = []
    for _ in range(DEPTH):
        blocks.append(dict(
            ln1g=jnp.ones((1, D), jnp.float32), ln1b=jnp.zeros((1, D), jnp.float32),
            wqkv=nrm((D, 3 * D), 0.02), bqkv=nrm((1, 3 * D), 0.01),
            wproj=nrm((D, D), 0.02), bproj=nrm((1, D), 0.01),
            ln2g=jnp.ones((1, D), jnp.float32), ln2b=jnp.zeros((1, D), jnp.float32),
            w1=nrm((D, MLP), 0.02), b1=nrm((1, MLP), 0.01),
            w2=nrm((MLP, D), 0.02), b2=nrm((1, D), 0.01)))
    return {
        # Conv3d(C, D, k=[1,P,P], s=[1,P,P]) re-expressed as a (K, D) projection
        "stem_w": nrm((K, D), 0.02),
        "stem_b": nrm((1, D), 0.01),
        "pos": nrm((N, D), 1e-5),          # learnable pos_embed, trunc_normal std=1e-5
        "normg": jnp.ones((1, D), jnp.float32),
        "normb": jnp.zeros((1, D), jnp.float32),
        "blocks": blocks,
    }


def pack_params(p):
    """Repack module-like params into the fused-kernel layout.

    Stacks per-block weights along a leading depth axis and folds 1/sqrt(DH)
    into the Q columns of wqkv/bqkv (exact). QKV and the output projection are
    kept as unsplit 2-D matrices (single lane-dense matmuls in the kernel).
    """
    scale = 1.0 / math.sqrt(DH)

    def stack(name):
        return jnp.stack([blk[name] for blk in p["blocks"]], axis=0)

    wqkv = stack("wqkv")                       # (DEPTH, D, 3D)
    bqkv = stack("bqkv")                       # (DEPTH, 1, 3D)
    wqkv = jnp.concatenate([wqkv[:, :, :D] * scale, wqkv[:, :, D:]], axis=-1)
    bqkv = jnp.concatenate([bqkv[:, :, :D] * scale, bqkv[:, :, D:]], axis=-1)

    return dict(
        stem_w=p["stem_w"], stem_b=p["stem_b"], pos=p["pos"],
        normg=p["normg"], normb=p["normb"],
        wqkv=wqkv, bqkv=bqkv,
        wproj=stack("wproj"), bproj=stack("bproj"),
        ln1g=stack("ln1g"), ln1b=stack("ln1b"),
        ln2g=stack("ln2g"), ln2b=stack("ln2b"),
        w1=stack("w1"), b1=stack("b1"),
        w2=stack("w2"), b2=stack("b2"))


# ---------------- full forward ----------------
def joint_transformer_forward(x, params):
    # x: (B, C, T, H, W) float32
    b, c, t, h, w = x.shape
    hp, wp = h // P, w // P
    # patchify (glue): (B,C,T,H,W) -> (B*T*hp*wp, C*P*P); token order (t,hp,wp)
    # and feature order (c, ph, pw) match the Conv3d stem flatten/permute.
    xp = x.reshape(b, c, t, hp, P, wp, P)
    xp = xp.transpose(0, 2, 3, 5, 1, 4, 6).reshape(b * t * hp * wp, c * P * P)

    pk = pack_params(params)   # tiny XLA reshapes; pre-pack once in a real model
    return fused_forward(xp, pk)                                 # (B, D)
    # TODO(synk): forward_pretrain (boolean-mask token gather) path not implemented.


if __name__ == "__main__":
    key = jax.random.PRNGKey(0)
    kx, kp = jax.random.split(key)
    x = jax.random.normal(kx, (B, C, T, IMG, IMG), jnp.float32)
    params = init_params(kp)

    fwd = jax.jit(joint_transformer_forward)
    out = jax.block_until_ready(fwd(x, params))
    assert out.shape == (B, D), out.shape
    assert bool(jnp.all(jnp.isfinite(out)))
    print("KERNEL_OK")
</pallas_src>

<mosaic_0001>
module attributes {stable_mosaic.version = 11 : i64} {
  func.func @fused_kernel(%arg0: i32, %arg1: memref<32x192xf32, #tpu.memory_space<vmem>>, %arg2: memref<192x32xf32, #tpu.memory_space<vmem>>, %arg3: memref<1x32xf32, #tpu.memory_space<vmem>>, %arg4: memref<16x32xf32, #tpu.memory_space<vmem>>, %arg5: memref<2x32x96xf32, #tpu.memory_space<vmem>>, %arg6: memref<2x1x96xf32, #tpu.memory_space<vmem>>, %arg7: memref<2x32x32xf32, #tpu.memory_space<vmem>>, %arg8: memref<2x1x32xf32, #tpu.memory_space<vmem>>, %arg9: memref<2x1x32xf32, #tpu.memory_space<vmem>>, %arg10: memref<2x1x32xf32, #tpu.memory_space<vmem>>, %arg11: memref<2x1x32xf32, #tpu.memory_space<vmem>>, %arg12: memref<2x1x32xf32, #tpu.memory_space<vmem>>, %arg13: memref<2x32x128xf32, #tpu.memory_space<vmem>>, %arg14: memref<2x1x128xf32, #tpu.memory_space<vmem>>, %arg15: memref<2x128x32xf32, #tpu.memory_space<vmem>>, %arg16: memref<2x1x32xf32, #tpu.memory_space<vmem>>, %arg17: memref<1x32xf32, #tpu.memory_space<vmem>>, %arg18: memref<1x32xf32, #tpu.memory_space<vmem>>, %arg19: memref<2x32xf32, #tpu.memory_space<vmem>>, %arg20: memref<32x32xf32, #tpu.memory_space<vmem>>) attributes {dimension_semantics = [#tpu.dimension_semantics<arbitrary>], iteration_bounds = array<i64: 2>, scalar_prefetch = 0 : i64, scratch_operands = 1 : i64, tpu.core_type = #tpu.core_type<tc>, window_params = [{pipeline_mode = #tpu.pipeline_mode<synchronous>, transform_indices = @transform_0, window_bounds = array<i64: 32, 192>}, {pipeline_mode = #tpu.pipeline_mode<synchronous>, transform_indices = @transform_1, window_bounds = array<i64: 192, 32>}, {pipeline_mode = #tpu.pipeline_mode<synchronous>, transform_indices = @transform_2, window_bounds = array<i64: 1, 32>}, {pipeline_mode = #tpu.pipeline_mode<synchronous>, transform_indices = @transform_3, window_bounds = array<i64: 16, 32>}, {pipeline_mode = #tpu.pipeline_mode<synchronous>, transform_indices = @transform_4, window_bounds = array<i64: 2, 32, 96>}, {pipeline_mode = #tpu.pipeline_mode<synchronous>, transform_indices = @transform_5, window_bounds = array<i64: 2, 1, 96>}, {pipeline_mode = #tpu.pipeline_mode<synchronous>, transform_indices = @transform_6, window_bounds = array<i64: 2, 32, 32>}, {pipeline_mode = #tpu.pipeline_mode<synchronous>, transform_indices = @transform_7, window_bounds = array<i64: 2, 1, 32>}, {pipeline_mode = #tpu.pipeline_mode<synchronous>, transform_indices = @transform_8, window_bounds = array<i64: 2, 1, 32>}, {pipeline_mode = #tpu.pipeline_mode<synchronous>, transform_indices = @transform_9, window_bounds = array<i64: 2, 1, 32>}, {pipeline_mode = #tpu.pipeline_mode<synchronous>, transform_indices = @transform_10, window_bounds = array<i64: 2, 1, 32>}, {pipeline_mode = #tpu.pipeline_mode<synchronous>, transform_indices = @transform_11, window_bounds = array<i64: 2, 1, 32>}, {pipeline_mode = #tpu.pipeline_mode<synchronous>, transform_indices = @transform_12, window_bounds = array<i64: 2, 32, 128>}, {pipeline_mode = #tpu.pipeline_mode<synchronous>, transform_indices = @transform_13, window_bounds = array<i64: 2, 1, 128>}, {pipeline_mode = #tpu.pipeline_mode<synchronous>, transform_indices = @transform_14, window_bounds = array<i64: 2, 128, 32>}, {pipeline_mode = #tpu.pipeline_mode<synchronous>, transform_indices = @transform_15, window_bounds = array<i64: 2, 1, 32>}, {pipeline_mode = #tpu.pipeline_mode<synchronous>, transform_indices = @transform_16, window_bounds = array<i64: 1, 32>}, {pipeline_mode = #tpu.pipeline_mode<synchronous>, transform_indices = @transform_17, window_bounds = array<i64: 1, 32>}, {pipeline_mode = #tpu.pipeline_mode<synchronous>, transform_indices = @transform_18, window_bounds = array<i64: 2, 32>}]} {
    %c0_i32 = arith.constant 0 : i32
    %0 = arith.cmpi eq, %arg0, %c0_i32 : i32
    %1 = arith.extui %0 : i1 to i32
    %c0_i32_0 = arith.constant 0 : i32
    %2 = arith.cmpi ne, %1, %c0_i32_0 : i32
    scf.if %2 {
      %c0_62 = arith.constant 0 : index
      %c0_63 = arith.constant 0 : index
      %178 = vector.load %arg1[%c0_62, %c0_63] : memref<32x192xf32, #tpu.memory_space<vmem>>, vector<32x192xf32>
      %c0_64 = arith.constant 0 : index
      %c0_65 = arith.constant 0 : index
      %179 = vector.load %arg2[%c0_64, %c0_65] : memref<192x32xf32, #tpu.memory_space<vmem>>, vector<192x32xf32>
      %cst_66 = arith.constant dense<0.000000e+00> : vector<32x32xf32>
      %180 = tpu.matmul %178, %179, %cst_66 {dimension_numbers = #tpu.dot_dimension_numbers<[1], [0], [0], [1], [0, 0, 1, 1], [], []>} : vector<32x192xf32>, vector<192x32xf32>, vector<32x32xf32> -> vector<32x32xf32>
      %c0_67 = arith.constant 0 : index
      %c0_68 = arith.constant 0 : index
      %181 = vector.load %arg3[%c0_67, %c0_68] : memref<1x32xf32, #tpu.memory_space<vmem>>, vector<1x32xf32>
      %182 = vector.broadcast %181 : vector<1x32xf32> to vector<32x32xf32>
      %183 = arith.addf %180, %182 : vector<32x32xf32>
      %c0_69 = arith.constant 0 : index
      %c0_70 = arith.constant 0 : index
      %184 = vector.load %arg4[%c0_69, %c0_70] : memref<16x32xf32, #tpu.memory_space<vmem>>, vector<16x32xf32>
      %185 = vector.shape_cast %184 : vector<16x32xf32> to vector<1x16x32xf32>
      %186 = vector.shape_cast %185 : vector<1x16x32xf32> to vector<1x16x32xf32>
      %187 = vector.broadcast %186 : vector<1x16x32xf32> to vector<2x16x32xf32>
      %188 = vector.shape_cast %187 : vector<2x16x32xf32> to vector<32x32xf32>
      %189 = arith.addf %183, %188 : vector<32x32xf32>
      %c0_71 = arith.constant 0 : index
      %c0_72 = arith.constant 0 : index
      %190 = vector.load %arg20[%c0_71, %c0_72] : memref<32x32xf32, #tpu.memory_space<vmem>>, vector<32x32xf32>
      tpu.vector_store %arg20[%c0_71, %c0_72], %189 {strides = array<i32>} : memref<32x32xf32, #tpu.memory_space<vmem>>, vector<32x32xf32>,
    } else {
    }
    %c0 = arith.constant 0 : index
    %c0_1 = arith.constant 0 : index
    %3 = vector.load %arg20[%c0, %c0_1] : memref<32x32xf32, #tpu.memory_space<vmem>>, vector<32x32xf32>
    %4 = arith.index_cast %arg0 : i32 to index
    %c0_2 = arith.constant 0 : index
    %c0_3 = arith.constant 0 : index
    %5 = vector.load %arg9[%4, %c0_2, %c0_3] : memref<2x1x32xf32, #tpu.memory_space<vmem>>, vector<1x1x32xf32>
    %6 = vector.shape_cast %5 : vector<1x1x32xf32> to vector<1x32xf32>
    %7 = arith.index_cast %arg0 : i32 to index
    %c0_4 = arith.constant 0 : index
    %c0_5 = arith.constant 0 : index
    %8 = vector.load %arg10[%7, %c0_4, %c0_5] : memref<2x1x32xf32, #tpu.memory_space<vmem>>, vector<1x1x32xf32>
    %9 = vector.shape_cast %8 : vector<1x1x32xf32> to vector<1x32xf32>
    %cst = arith.constant dense<0.000000e+00> : vector<32xf32>
    %10 = vector.multi_reduction <add>, %3, %cst [1] : vector<32x32xf32> to vector<32xf32>
    %11 = vector.shape_cast %10 : vector<32xf32> to vector<32x1xf32>
    %cst_6 = arith.constant 3.200000e+01 : f32
    %12 = vector.broadcast %cst_6 : f32 to vector<32x1xf32>
    %13 = arith.divf %11, %12 : vector<32x1xf32>
    %14 = vector.broadcast %13 : vector<32x1xf32> to vector<32x32xf32>
    %15 = arith.subf %3, %14 : vector<32x32xf32>
    %16 = arith.mulf %15, %15 : vector<32x32xf32>
    %cst_7 = arith.constant dense<0.000000e+00> : vector<32xf32>
    %17 = vector.multi_reduction <add>, %16, %cst_7 [1] : vector<32x32xf32> to vector<32xf32>
    %18 = vector.shape_cast %17 : vector<32xf32> to vector<32x1xf32>
    %cst_8 = arith.constant 3.200000e+01 : f32
    %19 = vector.broadcast %cst_8 : f32 to vector<32x1xf32>
    %20 = arith.divf %18, %19 : vector<32x1xf32>
    %21 = vector.broadcast %13 : vector<32x1xf32> to vector<32x32xf32>
    %22 = arith.subf %3, %21 : vector<32x32xf32>
    %cst_9 = arith.constant 9.99999997E-7 : f32
    %23 = vector.broadcast %cst_9 : f32 to vector<32x1xf32>
    %24 = arith.addf %20, %23 : vector<32x1xf32>
    %25 = math.rsqrt %24 : vector<32x1xf32>
    %26 = vector.broadcast %25 : vector<32x1xf32> to vector<32x32xf32>
    %27 = arith.mulf %22, %26 : vector<32x32xf32>
    %28 = vector.broadcast %6 : vector<1x32xf32> to vector<32x32xf32>
    %29 = arith.mulf %27, %28 : vector<32x32xf32>
    %30 = vector.broadcast %9 : vector<1x32xf32> to vector<32x32xf32>
    %31 = arith.addf %29, %30 : vector<32x32xf32>
    %32 = arith.index_cast %arg0 : i32 to index
    %c0_10 = arith.constant 0 : index
    %c0_11 = arith.constant 0 : index
    %33 = vector.load %arg5[%32, %c0_10, %c0_11] : memref<2x32x96xf32, #tpu.memory_space<vmem>>, vector<1x32x96xf32>
    %34 = vector.shape_cast %33 : vector<1x32x96xf32> to vector<32x96xf32>
    %cst_12 = arith.constant dense<0.000000e+00> : vector<32x96xf32>
    %35 = tpu.matmul %31, %34, %cst_12 {dimension_numbers = #tpu.dot_dimension_numbers<[1], [0], [0], [1], [0, 0, 1, 1], [], []>} : vector<32x32xf32>, vector<32x96xf32>, vector<32x96xf32> -> vector<32x96xf32>
    %36 = arith.index_cast %arg0 : i32 to index
    %c0_13 = arith.constant 0 : index
    %c0_14 = arith.constant 0 : index
    %37 = vector.load %arg6[%36, %c0_13, %c0_14] : memref<2x1x96xf32, #tpu.memory_space<vmem>>, vector<1x1x96xf32>
    %38 = vector.shape_cast %37 : vector<1x1x96xf32> to vector<1x96xf32>
    %39 = vector.broadcast %38 : vector<1x96xf32> to vector<32x96xf32>
    %40 = arith.addf %35, %39 : vector<32x96xf32>
    %41 = vector.shape_cast %40 : vector<32x96xf32> to vector<2x16x96xf32>
    %42 = vector.extract_strided_slice %41 {offsets = [0, 0, 0], sizes = [2, 16, 8], strides = [1, 1, 1]} : vector<2x16x96xf32> to vector<2x16x8xf32>
    %43 = vector.extract_strided_slice %41 {offsets = [0, 0, 32], sizes = [2, 16, 8], strides = [1, 1, 1]} : vector<2x16x96xf32> to vector<2x16x8xf32>
    %44 = vector.extract_strided_slice %41 {offsets = [0, 0, 64], sizes = [2, 16, 8], strides = [1, 1, 1]} : vector<2x16x96xf32> to vector<2x16x8xf32>
    %cst_15 = arith.constant dense<0.000000e+00> : vector<2x16x16xf32>
    %45 = tpu.matmul %42, %43, %cst_15 {dimension_numbers = #tpu.dot_dimension_numbers<[2], [2], [1], [1], [0, 0, 0, 1, 1, 1], [0], [0]>} : vector<2x16x8xf32>, vector<2x16x8xf32>, vector<2x16x16xf32> -> vector<2x16x16xf32>
    %cst_16 = arith.constant dense<0xFF800000> : vector<2x16xf32>
    %46 = vector.multi_reduction <maximumf>, %45, %cst_16 [2] : vector<2x16x16xf32> to vector<2x16xf32>
    %47 = vector.shape_cast %46 : vector<2x16xf32> to vector<2x16x1xf32>
    %48 = vector.broadcast %47 : vector<2x16x1xf32> to vector<2x16x16xf32>
    %49 = arith.subf %45, %48 : vector<2x16x16xf32>
    %50 = math.exp %49 : vector<2x16x16xf32>
    %cst_17 = arith.constant dense<0.000000e+00> : vector<2x16xf32>
    %51 = vector.multi_reduction <add>, %50, %cst_17 [2] : vector<2x16x16xf32> to vector<2x16xf32>
    %52 = vector.shape_cast %51 : vector<2x16xf32> to vector<2x16x1xf32>
    %53 = tpu.reciprocal %52 {approx = true} : vector<2x16x1xf32> -> vector<2x16x1xf32>
    %54 = vector.broadcast %53 : vector<2x16x1xf32> to vector<2x16x16xf32>
    %55 = arith.mulf %50, %54 : vector<2x16x16xf32>
    %cst_18 = arith.constant dense<0.000000e+00> : vector<2x16x8xf32>
    %56 = tpu.matmul %55, %44, %cst_18 {dimension_numbers = #tpu.dot_dimension_numbers<[2], [1], [1], [2], [0, 0, 0, 1, 1, 2], [0], [0]>} : vector<2x16x16xf32>, vector<2x16x8xf32>, vector<2x16x8xf32> -> vector<2x16x8xf32>
    %57 = vector.extract_strided_slice %41 {offsets = [0, 0, 8], sizes = [2, 16, 8], strides = [1, 1, 1]} : vector<2x16x96xf32> to vector<2x16x8xf32>
    %58 = vector.extract_strided_slice %41 {offsets = [0, 0, 40], sizes = [2, 16, 8], strides = [1, 1, 1]} : vector<2x16x96xf32> to vector<2x16x8xf32>
    %59 = vector.extract_strided_slice %41 {offsets = [0, 0, 72], sizes = [2, 16, 8], strides = [1, 1, 1]} : vector<2x16x96xf32> to vector<2x16x8xf32>
    %cst_19 = arith.constant dense<0.000000e+00> : vector<2x16x16xf32>
    %60 = tpu.matmul %57, %58, %cst_19 {dimension_numbers = #tpu.dot_dimension_numbers<[2], [2], [1], [1], [0, 0, 0, 1, 1, 1], [0], [0]>} : vector<2x16x8xf32>, vector<2x16x8xf32>, vector<2x16x16xf32> -> vector<2x16x16xf32>
    %cst_20 = arith.constant dense<0xFF800000> : vector<2x16xf32>
    %61 = vector.multi_reduction <maximumf>, %60, %cst_20 [2] : vector<2x16x16xf32> to vector<2x16xf32>
    %62 = vector.shape_cast %61 : vector<2x16xf32> to vector<2x16x1xf32>
    %63 = vector.broadcast %62 : vector<2x16x1xf32> to vector<2x16x16xf32>
    %64 = arith.subf %60, %63 : vector<2x16x16xf32>
    %65 = math.exp %64 : vector<2x16x16xf32>
    %cst_21 = arith.constant dense<0.000000e+00> : vector<2x16xf32>
    %66 = vector.multi_reduction <add>, %65, %cst_21 [2] : vector<2x16x16xf32> to vector<2x16xf32>
    %67 = vector.shape_cast %66 : vector<2x16xf32> to vector<2x16x1xf32>
    %68 = tpu.reciprocal %67 {approx = true} : vector<2x16x1xf32> -> vector<2x16x1xf32>
    %69 = vector.broadcast %68 : vector<2x16x1xf32> to vector<2x16x16xf32>
    %70 = arith.mulf %65, %69 : vector<2x16x16xf32>
    %cst_22 = arith.constant dense<0.000000e+00> : vector<2x16x8xf32>
    %71 = tpu.matmul %70, %59, %cst_22 {dimension_numbers = #tpu.dot_dimension_numbers<[2], [1], [1], [2], [0, 0, 0, 1, 1, 2], [0], [0]>} : vector<2x16x16xf32>, vector<2x16x8xf32>, vector<2x16x8xf32> -> vector<2x16x8xf32>
    %72 = vector.extract_strided_slice %41 {offsets = [0, 0, 16], sizes = [2, 16, 8], strides = [1, 1, 1]} : vector<2x16x96xf32> to vector<2x16x8xf32>
    %73 = vector.extract_strided_slice %41 {offsets = [0, 0, 48], sizes = [2, 16, 8], strides = [1, 1, 1]} : vector<2x16x96xf32> to vector<2x16x8xf32>
    %74 = vector.extract_strided_slice %41 {offsets = [0, 0, 80], sizes = [2, 16, 8], strides = [1, 1, 1]} : vector<2x16x96xf32> to vector<2x16x8xf32>
    %cst_23 = arith.constant dense<0.000000e+00> : vector<2x16x16xf32>
    %75 = tpu.matmul %72, %73, %cst_23 {dimension_numbers = #tpu.dot_dimension_numbers<[2], [2], [1], [1], [0, 0, 0, 1, 1, 1], [0], [0]>} : vector<2x16x8xf32>, vector<2x16x8xf32>, vector<2x16x16xf32> -> vector<2x16x16xf32>
    %cst_24 = arith.constant dense<0xFF800000> : vector<2x16xf32>
    %76 = vector.multi_reduction <maximumf>, %75, %cst_24 [2] : vector<2x16x16xf32> to vector<2x16xf32>
    %77 = vector.shape_cast %76 : vector<2x16xf32> to vector<2x16x1xf32>
    %78 = vector.broadcast %77 : vector<2x16x1xf32> to vector<2x16x16xf32>
    %79 = arith.subf %75, %78 : vector<2x16x16xf32>
    %80 = math.exp %79 : vector<2x16x16xf32>
    %cst_25 = arith.constant dense<0.000000e+00> : vector<2x16xf32>
    %81 = vector.multi_reduction <add>, %80, %cst_25 [2] : vector<2x16x16xf32> to vector<2x16xf32>
    %82 = vector.shape_cast %81 : vector<2x16xf32> to vector<2x16x1xf32>
    %83 = tpu.reciprocal %82 {approx = true} : vector<2x16x1xf32> -> vector<2x16x1xf32>
    %84 = vector.broadcast %83 : vector<2x16x1xf32> to vector<2x16x16xf32>
    %85 = arith.mulf %80, %84 : vector<2x16x16xf32>
    %cst_26 = arith.constant dense<0.000000e+00> : vector<2x16x8xf32>
    %86 = tpu.matmul %85, %74, %cst_26 {dimension_numbers = #tpu.dot_dimension_numbers<[2], [1], [1], [2], [0, 0, 0, 1, 1, 2], [0], [0]>} : vector<2x16x16xf32>, vector<2x16x8xf32>, vector<2x16x8xf32> -> vector<2x16x8xf32>
    %87 = vector.extract_strided_slice %41 {offsets = [0, 0, 24], sizes = [2, 16, 8], strides = [1, 1, 1]} : vector<2x16x96xf32> to vector<2x16x8xf32>
    %88 = vector.extract_strided_slice %41 {offsets = [0, 0, 56], sizes = [2, 16, 8], strides = [1, 1, 1]} : vector<2x16x96xf32> to vector<2x16x8xf32>
    %89 = vector.extract_strided_slice %41 {offsets = [0, 0, 88], sizes = [2, 16, 8], strides = [1, 1, 1]} : vector<2x16x96xf32> to vector<2x16x8xf32>
    %cst_27 = arith.constant dense<0.000000e+00> : vector<2x16x16xf32>
    %90 = tpu.matmul %87, %88, %cst_27 {dimension_numbers = #tpu.dot_dimension_numbers<[2], [2], [1], [1], [0, 0, 0, 1, 1, 1], [0], [0]>} : vector<2x16x8xf32>, vector<2x16x8xf32>, vector<2x16x16xf32> -> vector<2x16x16xf32>
    %cst_28 = arith.constant dense<0xFF800000> : vector<2x16xf32>
    %91 = vector.multi_reduction <maximumf>, %90, %cst_28 [2] : vector<2x16x16xf32> to vector<2x16xf32>
    %92 = vector.shape_cast %91 : vector<2x16xf32> to vector<2x16x1xf32>
    %93 = vector.broadcast %92 : vector<2x16x1xf32> to vector<2x16x16xf32>
    %94 = arith.subf %90, %93 : vector<2x16x16xf32>
    %95 = math.exp %94 : vector<2x16x16xf32>
    %cst_29 = arith.constant dense<0.000000e+00> : vector<2x16xf32>
    %96 = vector.multi_reduction <add>, %95, %cst_29 [2] : vector<2x16x16xf32> to vector<2x16xf32>
    %97 = vector.shape_cast %96 : vector<2x16xf32> to vector<2x16x1xf32>
    %98 = tpu.reciprocal %97 {approx = true} : vector<2x16x1xf32> -> vector<2x16x1xf32>
    %99 = vector.broadcast %98 : vector<2x16x1xf32> to vector<2x16x16xf32>
    %100 = arith.mulf %95, %99 : vector<2x16x16xf32>
    %cst_30 = arith.constant dense<0.000000e+00> : vector<2x16x8xf32>
    %101 = tpu.matmul %100, %89, %cst_30 {dimension_numbers = #tpu.dot_dimension_numbers<[2], [1], [1], [2], [0, 0, 0, 1, 1, 2], [0], [0]>} : vector<2x16x16xf32>, vector<2x16x8xf32>, vector<2x16x8xf32> -> vector<2x16x8xf32>
    %102 = tpu.concatenate %56, %71, %86, %101 in 2 : vector<2x16x8xf32>, vector<2x16x8xf32>, vector<2x16x8xf32>, vector<2x16x8xf32> -> vector<2x16x32xf32>
    %103 = vector.shape_cast %102 : vector<2x16x32xf32> to vector<32x32xf32>
    %104 = arith.index_cast %arg0 : i32 to index
    %c0_31 = arith.constant 0 : index
    %c0_32 = arith.constant 0 : index
    %105 = vector.load %arg7[%104, %c0_31, %c0_32] : memref<2x32x32xf32, #tpu.memory_space<vmem>>, vector<1x32x32xf32>
    %106 = vector.shape_cast %105 : vector<1x32x32xf32> to vector<32x32xf32>
    %cst_33 = arith.constant dense<0.000000e+00> : vector<32x32xf32>
    %107 = tpu.matmul %103, %106, %cst_33 {dimension_numbers = #tpu.dot_dimension_numbers<[1], [0], [0], [1], [0, 0, 1, 1], [], []>} : vector<32x32xf32>, vector<32x32xf32>, vector<32x32xf32> -> vector<32x32xf32>
    %108 = arith.index_cast %arg0 : i32 to index
    %c0_34 = arith.constant 0 : index
    %c0_35 = arith.constant 0 : index
    %109 = vector.load %arg8[%108, %c0_34, %c0_35] : memref<2x1x32xf32, #tpu.memory_space<vmem>>, vector<1x1x32xf32>
    %110 = vector.shape_cast %109 : vector<1x1x32xf32> to vector<1x32xf32>
    %111 = vector.broadcast %110 : vector<1x32xf32> to vector<32x32xf32>
    %112 = arith.addf %107, %111 : vector<32x32xf32>
    %113 = arith.addf %3, %112 : vector<32x32xf32>
    %114 = arith.index_cast %arg0 : i32 to index
    %c0_36 = arith.constant 0 : index
    %c0_37 = arith.constant 0 : index
    %115 = vector.load %arg11[%114, %c0_36, %c0_37] : memref<2x1x32xf32, #tpu.memory_space<vmem>>, vector<1x1x32xf32>
    %116 = vector.shape_cast %115 : vector<1x1x32xf32> to vector<1x32xf32>
    %117 = arith.index_cast %arg0 : i32 to index
    %c0_38 = arith.constant 0 : index
    %c0_39 = arith.constant 0 : index
    %118 = vector.load %arg12[%117, %c0_38, %c0_39] : memref<2x1x32xf32, #tpu.memory_space<vmem>>, vector<1x1x32xf32>
    %119 = vector.shape_cast %118 : vector<1x1x32xf32> to vector<1x32xf32>
    %cst_40 = arith.constant dense<0.000000e+00> : vector<32xf32>
    %120 = vector.multi_reduction <add>, %113, %cst_40 [1] : vector<32x32xf32> to vector<32xf32>
    %121 = vector.shape_cast %120 : vector<32xf32> to vector<32x1xf32>
    %cst_41 = arith.constant 3.200000e+01 : f32
    %122 = vector.broadcast %cst_41 : f32 to vector<32x1xf32>
    %123 = arith.divf %121, %122 : vector<32x1xf32>
    %124 = vector.broadcast %123 : vector<32x1xf32> to vector<32x32xf32>
    %125 = arith.subf %113, %124 : vector<32x32xf32>
    %126 = arith.mulf %125, %125 : vector<32x32xf32>
    %cst_42 = arith.constant dense<0.000000e+00> : vector<32xf32>
    %127 = vector.multi_reduction <add>, %126, %cst_42 [1] : vector<32x32xf32> to vector<32xf32>
    %128 = vector.shape_cast %127 : vector<32xf32> to vector<32x1xf32>
    %cst_43 = arith.constant 3.200000e+01 : f32
    %129 = vector.broadcast %cst_43 : f32 to vector<32x1xf32>
    %130 = arith.divf %128, %129 : vector<32x1xf32>
    %131 = vector.broadcast %123 : vector<32x1xf32> to vector<32x32xf32>
    %132 = arith.subf %113, %131 : vector<32x32xf32>
    %cst_44 = arith.constant 9.99999997E-7 : f32
    %133 = vector.broadcast %cst_44 : f32 to vector<32x1xf32>
    %134 = arith.addf %130, %133 : vector<32x1xf32>
    %135 = math.rsqrt %134 : vector<32x1xf32>
    %136 = vector.broadcast %135 : vector<32x1xf32> to vector<32x32xf32>
    %137 = arith.mulf %132, %136 : vector<32x32xf32>
    %138 = vector.broadcast %116 : vector<1x32xf32> to vector<32x32xf32>
    %139 = arith.mulf %137, %138 : vector<32x32xf32>
    %140 = vector.broadcast %119 : vector<1x32xf32> to vector<32x32xf32>
    %141 = arith.addf %139, %140 : vector<32x32xf32>
    %142 = arith.index_cast %arg0 : i32 to index
    %c0_45 = arith.constant 0 : index
    %c0_46 = arith.constant 0 : index
    %143 = vector.load %arg13[%142, %c0_45, %c0_46] : memref<2x32x128xf32, #tpu.memory_space<vmem>>, vector<1x32x128xf32>
    %144 = vector.shape_cast %143 : vector<1x32x128xf32> to vector<32x128xf32>
    %cst_47 = arith.constant dense<0.000000e+00> : vector<32x128xf32>
    %145 = tpu.matmul %141, %144, %cst_47 {dimension_numbers = #tpu.dot_dimension_numbers<[1], [0], [0], [1], [0, 0, 1, 1], [], []>} : vector<32x32xf32>, vector<32x128xf32>, vector<32x128xf32> -> vector<32x128xf32>
    %146 = arith.index_cast %arg0 : i32 to index
    %c0_48 = arith.constant 0 : index
    %c0_49 = arith.constant 0 : index
    %147 = vector.load %arg14[%146, %c0_48, %c0_49] : memref<2x1x128xf32, #tpu.memory_space<vmem>>, vector<1x1x128xf32>
    %148 = vector.shape_cast %147 : vector<1x1x128xf32> to vector<1x128xf32>
    %149 = vector.broadcast %148 : vector<1x128xf32> to vector<32x128xf32>
    %150 = arith.addf %145, %149 : vector<32x128xf32>
    %cst_50 = arith.constant 5.000000e-01 : f32
    %151 = vector.broadcast %cst_50 : f32 to vector<32x128xf32>
    %152 = arith.mulf %151, %150 : vector<32x128xf32>
    %cst_51 = arith.constant 4.471500e-02 : f32
    %153 = vector.broadcast %cst_51 : f32 to vector<32x128xf32>
    %154 = arith.mulf %153, %150 : vector<32x128xf32>
    %155 = arith.mulf %154, %150 : vector<32x128xf32>
    %156 = arith.mulf %155, %150 : vector<32x128xf32>
    %157 = arith.addf %150, %156 : vector<32x128xf32>
    %cst_52 = arith.constant 0.797884583 : f32
    %158 = vector.broadcast %cst_52 : f32 to vector<32x128xf32>
    %159 = arith.mulf %158, %157 : vector<32x128xf32>
    %160 = math.tanh %159 : vector<32x128xf32>
    %cst_53 = arith.constant 1.000000e+00 : f32
    %161 = vector.broadcast %cst_53 : f32 to vector<32x128xf32>
    %162 = arith.addf %161, %160 : vector<32x128xf32>
    %163 = arith.mulf %152, %162 : vector<32x128xf32>
    %164 = arith.index_cast %arg0 : i32 to index
    %c0_54 = arith.constant 0 : index
    %c0_55 = arith.constant 0 : index
    %165 = vector.load %arg15[%164, %c0_54, %c0_55] : memref<2x128x32xf32, #tpu.memory_space<vmem>>, vector<1x128x32xf32>
    %166 = vector.shape_cast %165 : vector<1x128x32xf32> to vector<128x32xf32>
    %cst_56 = arith.constant dense<0.000000e+00> : vector<32x32xf32>
    %167 = tpu.matmul %163, %166, %cst_56 {dimension_numbers = #tpu.dot_dimension_numbers<[1], [0], [0], [1], [0, 0, 1, 1], [], []>} : vector<32x128xf32>, vector<128x32xf32>, vector<32x32xf32> -> vector<32x32xf32>
    %168 = arith.index_cast %arg0 : i32 to index
    %c0_57 = arith.constant 0 : index
    %c0_58 = arith.constant 0 : index
    %169 = vector.load %arg16[%168, %c0_57, %c0_58] : memref<2x1x32xf32, #tpu.memory_space<vmem>>, vector<1x1x32xf32>
    %170 = vector.shape_cast %169 : vector<1x1x32xf32> to vector<1x32xf32>
    %171 = vector.broadcast %170 : vector<1x32xf32> to vector<32x32xf32>
    %172 = arith.addf %167, %171 : vector<32x32xf32>
    %173 = arith.addf %113, %172 : vector<32x32xf32>
    %c0_59 = arith.constant 0 : index
    %c0_60 = arith.constant 0 : index
    %174 = vector.load %arg20[%c0_59, %c0_60] : memref<32x32xf32, #tpu.memory_space<vmem>>, vector<32x32xf32>
    tpu.vector_store %arg20[%c0_59, %c0_60], %173 {strides = array<i32>} : memref<32x32xf32, #tpu.memory_space<vmem>>, vector<32x32xf32>,
    %c1_i32 = arith.constant 1 : i32
    %175 = arith.cmpi eq, %arg0, %c1_i32 : i32
    %176 = arith.extui %175 : i1 to i32
    %c0_i32_61 = arith.constant 0 : i32
    %177 = arith.cmpi ne, %176, %c0_i32_61 : i32
    scf.if %177 {
      %c0_62 = arith.constant 0 : index
      %c0_63 = arith.constant 0 : index
      %178 = vector.load %arg20[%c0_62, %c0_63] : memref<32x32xf32, #tpu.memory_space<vmem>>, vector<32x32xf32>
      %c0_64 = arith.constant 0 : index
      %c0_65 = arith.constant 0 : index
      %179 = vector.load %arg17[%c0_64, %c0_65] : memref<1x32xf32, #tpu.memory_space<vmem>>, vector<1x32xf32>
      %c0_66 = arith.constant 0 : index
      %c0_67 = arith.constant 0 : index
      %180 = vector.load %arg18[%c0_66, %c0_67] : memref<1x32xf32, #tpu.memory_space<vmem>>, vector<1x32xf32>
      %cst_68 = arith.constant dense<0.000000e+00> : vector<32xf32>
      %181 = vector.multi_reduction <add>, %178, %cst_68 [1] : vector<32x32xf32> to vector<32xf32>
      %182 = vector.shape_cast %181 : vector<32xf32> to vector<32x1xf32>
      %cst_69 = arith.constant 3.200000e+01 : f32
      %183 = vector.broadcast %cst_69 : f32 to vector<32x1xf32>
      %184 = arith.divf %182, %183 : vector<32x1xf32>
      %185 = vector.broadcast %184 : vector<32x1xf32> to vector<32x32xf32>
      %186 = arith.subf %178, %185 : vector<32x32xf32>
      %187 = arith.mulf %186, %186 : vector<32x32xf32>
      %cst_70 = arith.constant dense<0.000000e+00> : vector<32xf32>
      %188 = vector.multi_reduction <add>, %187, %cst_70 [1] : vector<32x32xf32> to vector<32xf32>
      %189 = vector.shape_cast %188 : vector<32xf32> to vector<32x1xf32>
      %cst_71 = arith.constant 3.200000e+01 : f32
      %190 = vector.broadcast %cst_71 : f32 to vector<32x1xf32>
      %191 = arith.divf %189, %190 : vector<32x1xf32>
      %192 = vector.broadcast %184 : vector<32x1xf32> to vector<32x32xf32>
      %193 = arith.subf %178, %192 : vector<32x32xf32>
      %cst_72 = arith.constant 9.99999997E-7 : f32
      %194 = vector.broadcast %cst_72 : f32 to vector<32x1xf32>
      %195 = arith.addf %191, %194 : vector<32x1xf32>
      %196 = math.rsqrt %195 : vector<32x1xf32>
      %197 = vector.broadcast %196 : vector<32x1xf32> to vector<32x32xf32>
      %198 = arith.mulf %193, %197 : vector<32x32xf32>
      %199 = vector.broadcast %179 : vector<1x32xf32> to vector<32x32xf32>
      %200 = arith.mulf %198, %199 : vector<32x32xf32>
      %201 = vector.broadcast %180 : vector<1x32xf32> to vector<32x32xf32>
      %202 = arith.addf %200, %201 : vector<32x32xf32>
      %203 = vector.shape_cast %202 : vector<32x32xf32> to vector<2x16x32xf32>
      %cst_73 = arith.constant dense<0.000000e+00> : vector<2x32xf32>
      %204 = vector.multi_reduction <add>, %203, %cst_73 [1] : vector<2x16x32xf32> to vector<2x32xf32>
      %cst_74 = arith.constant 1.600000e+01 : f32
      %205 = vector.broadcast %cst_74 : f32 to vector<2x32xf32>
      %206 = arith.divf %204, %205 : vector<2x32xf32>
      %c0_75 = arith.constant 0 : index
      %c0_76 = arith.constant 0 : index
      %207 = vector.load %arg19[%c0_75, %c0_76] : memref<2x32xf32, #tpu.memory_space<vmem>>, vector<2x32xf32>
      tpu.vector_store %arg19[%c0_75, %c0_76], %206 {strides = array<i32>} : memref<2x32xf32, #tpu.memory_space<vmem>>, vector<2x32xf32>,
    } else {
    }
    return
  }
  func.func @transform_0(%arg0: i32) -> (i32, i32) {
    %c0_i32 = arith.constant 0 : i32
    %c0_i32_0 = arith.constant 0 : i32
    %c0_i32_1 = arith.constant 0 : i32
    return %c0_i32, %c0_i32_0 : i32, i32
  }
  func.func @transform_1(%arg0: i32) -> (i32, i32) {
    %c0_i32 = arith.constant 0 : i32
    %c0_i32_0 = arith.constant 0 : i32
    %c0_i32_1 = arith.constant 0 : i32
    return %c0_i32, %c0_i32_0 : i32, i32
  }
  func.func @transform_2(%arg0: i32) -> (i32, i32) {
    %c0_i32 = arith.constant 0 : i32
    %c0_i32_0 = arith.constant 0 : i32
    %c0_i32_1 = arith.constant 0 : i32
    return %c0_i32, %c0_i32_0 : i32, i32
  }
  func.func @transform_3(%arg0: i32) -> (i32, i32) {
    %c0_i32 = arith.constant 0 : i32
    %c0_i32_0 = arith.constant 0 : i32
    %c0_i32_1 = arith.constant 0 : i32
    return %c0_i32, %c0_i32_0 : i32, i32
  }
  func.func @transform_4(%arg0: i32) -> (i32, i32, i32) {
    %c0_i32 = arith.constant 0 : i32
    %c0_i32_0 = arith.constant 0 : i32
    %c0_i32_1 = arith.constant 0 : i32
    %c0_i32_2 = arith.constant 0 : i32
    return %c0_i32, %c0_i32_0, %c0_i32_1 : i32, i32, i32
  }
  func.func @transform_5(%arg0: i32) -> (i32, i32, i32) {
    %c0_i32 = arith.constant 0 : i32
    %c0_i32_0 = arith.constant 0 : i32
    %c0_i32_1 = arith.constant 0 : i32
    %c0_i32_2 = arith.constant 0 : i32
    return %c0_i32, %c0_i32_0, %c0_i32_1 : i32, i32, i32
  }
  func.func @transform_6(%arg0: i32) -> (i32, i32, i32) {
    %c0_i32 = arith.constant 0 : i32
    %c0_i32_0 = arith.constant 0 : i32
    %c0_i32_1 = arith.constant 0 : i32
    %c0_i32_2 = arith.constant 0 : i32
    return %c0_i32, %c0_i32_0, %c0_i32_1 : i32, i32, i32
  }
  func.func @transform_7(%arg0: i32) -> (i32, i32, i32) {
    %c0_i32 = arith.constant 0 : i32
    %c0_i32_0 = arith.constant 0 : i32
    %c0_i32_1 = arith.constant 0 : i32
    %c0_i32_2 = arith.constant 0 : i32
    return %c0_i32, %c0_i32_0, %c0_i32_1 : i32, i32, i32
  }
  func.func @transform_8(%arg0: i32) -> (i32, i32, i32) {
    %c0_i32 = arith.constant 0 : i32
    %c0_i32_0 = arith.constant 0 : i32
    %c0_i32_1 = arith.constant 0 : i32
    %c0_i32_2 = arith.constant 0 : i32
    return %c0_i32, %c0_i32_0, %c0_i32_1 : i32, i32, i32
  }
  func.func @transform_9(%arg0: i32) -> (i32, i32, i32) {
    %c0_i32 = arith.constant 0 : i32
    %c0_i32_0 = arith.constant 0 : i32
    %c0_i32_1 = arith.constant 0 : i32
    %c0_i32_2 = arith.constant 0 : i32
    return %c0_i32, %c0_i32_0, %c0_i32_1 : i32, i32, i32
  }
  func.func @transform_10(%arg0: i32) -> (i32, i32, i32) {
    %c0_i32 = arith.constant 0 : i32
    %c0_i32_0 = arith.constant 0 : i32
    %c0_i32_1 = arith.constant 0 : i32
    %c0_i32_2 = arith.constant 0 : i32
    return %c0_i32, %c0_i32_0, %c0_i32_1 : i32, i32, i32
  }
  func.func @transform_11(%arg0: i32) -> (i32, i32, i32) {
    %c0_i32 = arith.constant 0 : i32
    %c0_i32_0 = arith.constant 0 : i32
    %c0_i32_1 = arith.constant 0 : i32
    %c0_i32_2 = arith.constant 0 : i32
    return %c0_i32, %c0_i32_0, %c0_i32_1 : i32, i32, i32
  }
  func.func @transform_12(%arg0: i32) -> (i32, i32, i32) {
    %c0_i32 = arith.constant 0 : i32
    %c0_i32_0 = arith.constant 0 : i32
    %c0_i32_1 = arith.constant 0 : i32
    %c0_i32_2 = arith.constant 0 : i32
    return %c0_i32, %c0_i32_0, %c0_i32_1 : i32, i32, i32
  }
  func.func @transform_13(%arg0: i32) -> (i32, i32, i32) {
    %c0_i32 = arith.constant 0 : i32
    %c0_i32_0 = arith.constant 0 : i32
    %c0_i32_1 = arith.constant 0 : i32
    %c0_i32_2 = arith.constant 0 : i32
    return %c0_i32, %c0_i32_0, %c0_i32_1 : i32, i32, i32
  }
  func.func @transform_14(%arg0: i32) -> (i32, i32, i32) {
    %c0_i32 = arith.constant 0 : i32
    %c0_i32_0 = arith.constant 0 : i32
    %c0_i32_1 = arith.constant 0 : i32
    %c0_i32_2 = arith.constant 0 : i32
    return %c0_i32, %c0_i32_0, %c0_i32_1 : i32, i32, i32
  }
  func.func @transform_15(%arg0: i32) -> (i32, i32, i32) {
    %c0_i32 = arith.constant 0 : i32
    %c0_i32_0 = arith.constant 0 : i32
    %c0_i32_1 = arith.constant 0 : i32
    %c0_i32_2 = arith.constant 0 : i32
    return %c0_i32, %c0_i32_0, %c0_i32_1 : i32, i32, i32
  }
  func.func @transform_16(%arg0: i32) -> (i32, i32) {
    %c0_i32 = arith.constant 0 : i32
    %c0_i32_0 = arith.constant 0 : i32
    %c0_i32_1 = arith.constant 0 : i32
    return %c0_i32, %c0_i32_0 : i32, i32
  }
  func.func @transform_17(%arg0: i32) -> (i32, i32) {
    %c0_i32 = arith.constant 0 : i32
    %c0_i32_0 = arith.constant 0 : i32
    %c0_i32_1 = arith.constant 0 : i32
    return %c0_i32, %c0_i32_0 : i32, i32
  }
  func.func @transform_18(%arg0: i32) -> (i32, i32) {
    %c0_i32 = arith.constant 0 : i32
    %c0_i32_0 = arith.constant 0 : i32
    %c0_i32_1 = arith.constant 0 : i32
    return %c0_i32, %c0_i32_0 : i32, i32
  }
}

</mosaic_0001>

<llo_original>
// kernel: joint_transformer_forward.1
$region0: #{joint_transformer_forward.1}
  #allocation0 [shape = 'u32[]', space=smem, size = 0x4, offset = 0x4, fixed_abs, tag = 'smem constant byte address 0x4 - core index']
  #allocation1 [shape = 'u32[72,128]{1,0:T(1,128)}', space=vmem, size = 0x9000, scoped, tag = 'internal scratch']
  #allocation2 [shape = 'f32[32,32]{1,0:T(8,128)}', space=vmem, size = 0x4000, scoped, tag = 'scratch operand']
  %s0 = inlined_call_operand.vmem [shape: f32[32,192], index: 0, kind: input, shape index: {}]
  %s1 = inlined_call_operand.vmem [shape: f32[192,32], index: 1, kind: input, shape index: {}]
  %s2 = inlined_call_operand.vmem [shape: f32[1,32], index: 2, kind: input, shape index: {}]
  %s3 = inlined_call_operand.vmem [shape: f32[16,32], index: 3, kind: input, shape index: {}]
  %s4 = inlined_call_operand.vmem [shape: f32[2,32,96], index: 4, kind: input, shape index: {}]
  %s5 = inlined_call_operand.vmem [shape: f32[2,1,96], index: 5, kind: input, shape index: {}]
  %s6 = inlined_call_operand.vmem [shape: f32[2,32,32], index: 6, kind: input, shape index: {}]
  %s7 = inlined_call_operand.vmem [shape: f32[2,1,32], index: 7, kind: input, shape index: {}]
  %s8 = inlined_call_operand.vmem [shape: f32[2,1,32], index: 8, kind: input, shape index: {}]
  %s9 = inlined_call_operand.vmem [shape: f32[2,1,32], index: 9, kind: input, shape index: {}]
  %s10 = inlined_call_operand.vmem [shape: f32[2,1,32], index: 10, kind: input, shape index: {}]
  %s11 = inlined_call_operand.vmem [shape: f32[2,1,32], index: 11, kind: input, shape index: {}]
  %s12 = inlined_call_operand.vmem [shape: f32[2,32,128], index: 12, kind: input, shape index: {}]
  %s13 = inlined_call_operand.vmem [shape: f32[2,1,128], index: 13, kind: input, shape index: {}]
  %s14 = inlined_call_operand.vmem [shape: f32[2,128,32], index: 14, kind: input, shape index: {}]
  %s15 = inlined_call_operand.vmem [shape: f32[2,1,32], index: 15, kind: input, shape index: {}]
  %s16 = inlined_call_operand.vmem [shape: f32[1,32], index: 16, kind: input, shape index: {}]
  %s17 = inlined_call_operand.vmem [shape: f32[1,32], index: 17, kind: input, shape index: {}]
  %s18 = inlined_call_operand.hbm [shape: f32[2,32], index: 18, kind: output, shape index: {}]
  %s19 = sld [smem:[#allocation0]]
  $region113: #{joint_transformer_forward.1} parent=0
    _
  %s21 = ssub.s32 1, %s19
  %s22 = scalar_select 0, %s21, %s19
  $region1: #{joint_transformer_forward.1} parent=0
    #allocation3 [shape = 'u8[1024]{0}', space=vmem, size = 0x400, scoped, tag = 'output window, operand 0, single buffered']
    #allocation4 [shape = 's32[2]{0}', space=sflag, size = 0x8, scoped, tag = 'scoped memory for joint_transformer_forward.1']
    %23 = vsyncpa [#allocation4], 0
    loop: start=0, step=1, limit=4
    $region2: #{joint_transformer_forward.1} parent=1 // loop_pre_header
      _
    $region3: #{joint_transformer_forward.1} parent=1 // loop_header
      %s25 = sphi 0, %s29
      %p26 = scmp.ge.s32.totalorder %s25, 4
      %s33 = sphi 0, %s33
      %s35 = sphi 0, %s33
      %s36 = sphi 0, %s35
      %s50 = sphi 0, %s36
      %s54 = sphi 0, %s54
      %s56 = sphi 0, %s54
      %s57 = sphi 0, %s56
      %s71 = sphi 0, %s57
      %s75 = sphi 0, %s75
      %s77 = sphi 0, %s75
      %s78 = sphi 0, %s77
      %s92 = sphi 0, %s78
      %s96 = sphi 0, %s96
      %s98 = sphi 0, %s96
      %s99 = sphi 0, %s98
      %s113 = sphi 0, %s99
      %s117 = sphi 0, %s117
      %s119 = sphi 0, %s117
      %s120 = sphi 0, %s119
      %s134 = sphi 0, %s120
      %s138 = sphi 0, %s138
      %s140 = sphi 0, %s138
      %s141 = sphi 0, %s140
      %s155 = sphi 0, %s141
      %s159 = sphi 0, %s159
      %s161 = sphi 0, %s159
      %s162 = sphi 0, %s161
      %s176 = sphi 0, %s162
      %s180 = sphi 0, %s180
      %s182 = sphi 0, %s180
      %s183 = sphi 0, %s182
      %s197 = sphi 0, %s183
      %s201 = sphi 0, %s201
      %s203 = sphi 0, %s201
      %s204 = sphi 0, %s203
      %s218 = sphi 0, %s204
      %s222 = sphi 0, %s222
      %s224 = sphi 0, %s222
      %s225 = sphi 0, %s224
      %s239 = sphi 0, %s225
      %s243 = sphi 0, %s243
      %s245 = sphi 0, %s243
      %s246 = sphi 0, %s245
      %s260 = sphi 0, %s246
      %s264 = sphi 0, %s264
      %s266 = sphi 0, %s264
      %s267 = sphi 0, %s266
      %s281 = sphi 0, %s267
      %s285 = sphi 0, %s285
      %s287 = sphi 0, %s285
      %s288 = sphi 0, %s287
      %s302 = sphi 0, %s288
      %s306 = sphi 0, %s306
      %s308 = sphi 0, %s306
      %s309 = sphi 0, %s308
      %s323 = sphi 0, %s309
      %s327 = sphi 0, %s327
      %s329 = sphi 0, %s327
      %s330 = sphi 0, %s329
      %s344 = sphi 0, %s330
      %s348 = sphi 0, %s348
      %s350 = sphi 0, %s348
      %s351 = sphi 0, %s350
      %s365 = sphi 0, %s351
      %s369 = sphi 0, %s369
      %s371 = sphi 0, %s369
      %s372 = sphi 0, %s371
      %s386 = sphi 0, %s372
      %s390 = sphi 0, %s390
      %s392 = sphi 0, %s390
      %s393 = sphi 0, %s392
      %s407 = sphi 0, %s393
      %s411 = sphi 0, %s411
      %s413 = sphi 0, %s411
      %s414 = sphi 0, %s413
      %s428 = sphi 0, %s414
    $region4: #{joint_transformer_forward.1} parent=1 // loop_header_branch
      %28 = sbr.rel (%p26) target = $region8
    $region5: #{joint_transformer_forward.1} parent=1 // loop_body
      %s30 = ssub.s32 %s25, 1
      %s31 = ssub.s32 %s25, 2
      %s32 = sadd.s32 %s25, 1
      %s34 = sadd.s32 %s33, 1
      %p37 = scmp.eq.s32.totalorder %s25, 1
      %p38 = scmp.ne.s32.totalorder %s33, %s35
      %p39 = scmp.eq.s32.totalorder %s25, 0
      %p40 = por %p38, %p39
      %p41 = scmp.ne.s32.totalorder %s33, %s35
      %p42 = scmp.eq.s32.totalorder %s30, 1
      %p43 = por %p41, %p42
      %p44 = scmp.ne.s32.totalorder %s35, %s36
      %p45 = scmp.eq.s32.totalorder %s30, 0
      %p46 = por %p44, %p45
      %p47 = scmp.ne.s32.totalorder %s35, %s36
      %p48 = scmp.eq.s32.totalorder %s31, 1
      %p49 = por %p47, %p48
      %p51 = scmp.ne.s32.totalorder %s36, %s50
      %p52 = scmp.eq.s32.totalorder %s31, 0
      %p53 = por %p51, %p52
      %s55 = sadd.s32 %s54, 1
      %p58 = scmp.eq.s32.totalorder %s25, 1
      %p59 = scmp.ne.s32.totalorder %s54, %s56
      %p60 = scmp.eq.s32.totalorder %s25, 0
      %p61 = por %p59, %p60
      %p62 = scmp.ne.s32.totalorder %s54, %s56
      %p63 = scmp.eq.s32.totalorder %s30, 1
      %p64 = por %p62, %p63
      %p65 = scmp.ne.s32.totalorder %s56, %s57
      %p66 = scmp.eq.s32.totalorder %s30, 0
      %p67 = por %p65, %p66
      %p68 = scmp.ne.s32.totalorder %s56, %s57
      %p69 = scmp.eq.s32.totalorder %s31, 1
      %p70 = por %p68, %p69
      %p72 = scmp.ne.s32.totalorder %s57, %s71
      %p73 = scmp.eq.s32.totalorder %s31, 0
      %p74 = por %p72, %p73
      %s76 = sadd.s32 %s75, 1
      %p79 = scmp.eq.s32.totalorder %s25, 1
      %p80 = scmp.ne.s32.totalorder %s75, %s77
      %p81 = scmp.eq.s32.totalorder %s25, 0
      %p82 = por %p80, %p81
      %p83 = scmp.ne.s32.totalorder %s75, %s77
      %p84 = scmp.eq.s32.totalorder %s30, 1
      %p85 = por %p83, %p84
      %p86 = scmp.ne.s32.totalorder %s77, %s78
      %p87 = scmp.eq.s32.totalorder %s30, 0
      %p88 = por %p86, %p87
      %p89 = scmp.ne.s32.totalorder %s77, %s78
      %p90 = scmp.eq.s32.totalorder %s31, 1
      %p91 = por %p89, %p90
      %p93 = scmp.ne.s32.totalorder %s78, %s92
      %p94 = scmp.eq.s32.totalorder %s31, 0
      %p95 = por %p93, %p94
      %s97 = sadd.s32 %s96, 1
      %p100 = scmp.eq.s32.totalorder %s25, 1
      %p101 = scmp.ne.s32.totalorder %s96, %s98
      %p102 = scmp.eq.s32.totalorder %s25, 0
      %p103 = por %p101, %p102
      %p104 = scmp.ne.s32.totalorder %s96, %s98
      %p105 = scmp.eq.s32.totalorder %s30, 1
      %p106 = por %p104, %p105
      %p107 = scmp.ne.s32.totalorder %s98, %s99
      %p108 = scmp.eq.s32.totalorder %s30, 0
      %p109 = por %p107, %p108
      %p110 = scmp.ne.s32.totalorder %s98, %s99
      %p111 = scmp.eq.s32.totalorder %s31, 1
      %p112 = por %p110, %p111
      %p114 = scmp.ne.s32.totalorder %s99, %s113
      %p115 = scmp.eq.s32.totalorder %s31, 0
      %p116 = por %p114, %p115
      %s118 = sadd.s32 %s117, 1
      %p121 = scmp.eq.s32.totalorder %s25, 1
      %p122 = scmp.ne.s32.totalorder %s117, %s119
      %p123 = scmp.eq.s32.totalorder %s25, 0
      %p124 = por %p122, %p123
      %p125 = scmp.ne.s32.totalorder %s117, %s119
      %p126 = scmp.eq.s32.totalorder %s30, 1
      %p127 = por %p125, %p126
      %p128 = scmp.ne.s32.totalorder %s119, %s120
      %p129 = scmp.eq.s32.totalorder %s30, 0
      %p130 = por %p128, %p129
      %p131 = scmp.ne.s32.totalorder %s119, %s120
      %p132 = scmp.eq.s32.totalorder %s31, 1
      %p133 = por %p131, %p132
      %p135 = scmp.ne.s32.totalorder %s120, %s134
      %p136 = scmp.eq.s32.totalorder %s31, 0
      %p137 = por %p135, %p136
      %s139 = sadd.s32 %s138, 1
      %p142 = scmp.eq.s32.totalorder %s25, 1
      %p143 = scmp.ne.s32.totalorder %s138, %s140
      %p144 = scmp.eq.s32.totalorder %s25, 0
      %p145 = por %p143, %p144
      %p146 = scmp.ne.s32.totalorder %s138, %s140
      %p147 = scmp.eq.s32.totalorder %s30, 1
      %p148 = por %p146, %p147
      %p149 = scmp.ne.s32.totalorder %s140, %s141
      %p150 = scmp.eq.s32.totalorder %s30, 0
      %p151 = por %p149, %p150
      %p152 = scmp.ne.s32.totalorder %s140, %s141
      %p153 = scmp.eq.s32.totalorder %s31, 1
      %p154 = por %p152, %p153
      %p156 = scmp.ne.s32.totalorder %s141, %s155
      %p157 = scmp.eq.s32.totalorder %s31, 0
      %p158 = por %p156, %p157
      %s160 = sadd.s32 %s159, 1
      %p163 = scmp.eq.s32.totalorder %s25, 1
      %p164 = scmp.ne.s32.totalorder %s159, %s161
      %p165 = scmp.eq.s32.totalorder %s25, 0
      %p166 = por %p164, %p165
      %p167 = scmp.ne.s32.totalorder %s159, %s161
      %p168 = scmp.eq.s32.totalorder %s30, 1
      %p169 = por %p167, %p168
      %p170 = scmp.ne.s32.totalorder %s161, %s162
      %p171 = scmp.eq.s32.totalorder %s30, 0
      %p172 = por %p170, %p171
      %p173 = scmp.ne.s32.totalorder %s161, %s162
      %p174 = scmp.eq.s32.totalorder %s31, 1
      %p175 = por %p173, %p174
      %p177 = scmp.ne.s32.totalorder %s162, %s176
      %p178 = scmp.eq.s32.totalorder %s31, 0
      %p179 = por %p177, %p178
      %s181 = sadd.s32 %s180, 1
      %p184 = scmp.eq.s32.totalorder %s25, 1
      %p185 = scmp.ne.s32.totalorder %s180, %s182
      %p186 = scmp.eq.s32.totalorder %s25, 0
      %p187 = por %p185, %p186
      %p188 = scmp.ne.s32.totalorder %s180, %s182
      %p189 = scmp.eq.s32.totalorder %s30, 1
      %p190 = por %p188, %p189
      %p191 = scmp.ne.s32.totalorder %s182, %s183
      %p192 = scmp.eq.s32.totalorder %s30, 0
      %p193 = por %p191, %p192
      %p194 = scmp.ne.s32.totalorder %s182, %s183
      %p195 = scmp.eq.s32.totalorder %s31, 1
      %p196 = por %p194, %p195
      %p198 = scmp.ne.s32.totalorder %s183, %s197
      %p199 = scmp.eq.s32.totalorder %s31, 0
      %p200 = por %p198, %p199
      %s202 = sadd.s32 %s201, 1
      %p205 = scmp.eq.s32.totalorder %s25, 1
      %p206 = scmp.ne.s32.totalorder %s201, %s203
      %p207 = scmp.eq.s32.totalorder %s25, 0
      %p208 = por %p206, %p207
      %p209 = scmp.ne.s32.totalorder %s201, %s203
      %p210 = scmp.eq.s32.totalorder %s30, 1
      %p211 = por %p209, %p210
      %p212 = scmp.ne.s32.totalorder %s203, %s204
      %p213 = scmp.eq.s32.totalorder %s30, 0
      %p214 = por %p212, %p213
      %p215 = scmp.ne.s32.totalorder %s203, %s204
      %p216 = scmp.eq.s32.totalorder %s31, 1
      %p217 = por %p215, %p216
      %p219 = scmp.ne.s32.totalorder %s204, %s218
      %p220 = scmp.eq.s32.totalorder %s31, 0
      %p221 = por %p219, %p220
      %s223 = sadd.s32 %s222, 1
      %p226 = scmp.eq.s32.totalorder %s25, 1
      %p227 = scmp.ne.s32.totalorder %s222, %s224
      %p228 = scmp.eq.s32.totalorder %s25, 0
      %p229 = por %p227, %p228
      %p230 = scmp.ne.s32.totalorder %s222, %s224
      %p231 = scmp.eq.s32.totalorder %s30, 1
      %p232 = por %p230, %p231
      %p233 = scmp.ne.s32.totalorder %s224, %s225
      %p234 = scmp.eq.s32.totalorder %s30, 0
      %p235 = por %p233, %p234
      %p236 = scmp.ne.s32.totalorder %s224, %s225
      %p237 = scmp.eq.s32.totalorder %s31, 1
      %p238 = por %p236, %p237
      %p240 = scmp.ne.s32.totalorder %s225, %s239
      %p241 = scmp.eq.s32.totalorder %s31, 0
      %p242 = por %p240, %p241
      %s244 = sadd.s32 %s243, 1
      %p247 = scmp.eq.s32.totalorder %s25, 1
      %p248 = scmp.ne.s32.totalorder %s243, %s245
      %p249 = scmp.eq.s32.totalorder %s25, 0
      %p250 = por %p248, %p249
      %p251 = scmp.ne.s32.totalorder %s243, %s245
      %p252 = scmp.eq.s32.totalorder %s30, 1
      %p253 = por %p251, %p252
      %p254 = scmp.ne.s32.totalorder %s245, %s246
      %p255 = scmp.eq.s32.totalorder %s30, 0
      %p256 = por %p254, %p255
      %p257 = scmp.ne.s32.totalorder %s245, %s246
      %p258 = scmp.eq.s32.totalorder %s31, 1
      %p259 = por %p257, %p258
      %p261 = scmp.ne.s32.totalorder %s246, %s260
      %p262 = scmp.eq.s32.totalorder %s31, 0
      %p263 = por %p261, %p262
      %s265 = sadd.s32 %s264, 1
      %p268 = scmp.eq.s32.totalorder %s25, 1
      %p269 = scmp.ne.s32.totalorder %s264, %s266
      %p270 = scmp.eq.s32.totalorder %s25, 0
      %p271 = por %p269, %p270
      %p272 = scmp.ne.s32.totalorder %s264, %s266
      %p273 = scmp.eq.s32.totalorder %s30, 1
      %p274 = por %p272, %p273
      %p275 = scmp.ne.s32.totalorder %s266, %s267
      %p276 = scmp.eq.s32.totalorder %s30, 0
      %p277 = por %p275, %p276
      %p278 = scmp.ne.s32.totalorder %s266, %s267
      %p279 = scmp.eq.s32.totalorder %s31, 1
      %p280 = por %p278, %p279
      %p282 = scmp.ne.s32.totalorder %s267, %s281
      %p283 = scmp.eq.s32.totalorder %s31, 0
      %p284 = por %p282, %p283
      %s286 = sadd.s32 %s285, 1
      %p289 = scmp.eq.s32.totalorder %s25, 1
      %p290 = scmp.ne.s32.totalorder %s285, %s287
      %p291 = scmp.eq.s32.totalorder %s25, 0
      %p292 = por %p290, %p291
      %p293 = scmp.ne.s32.totalorder %s285, %s287
      %p294 = scmp.eq.s32.totalorder %s30, 1
      %p295 = por %p293, %p294
      %p296 = scmp.ne.s32.totalorder %s287, %s288
      %p297 = scmp.eq.s32.totalorder %s30, 0
      %p298 = por %p296, %p297
      %p299 = scmp.ne.s32.totalorder %s287, %s288
      %p300 = scmp.eq.s32.totalorder %s31, 1
      %p301 = por %p299, %p300
      %p303 = scmp.ne.s32.totalorder %s288, %s302
      %p304 = scmp.eq.s32.totalorder %s31, 0
      %p305 = por %p303, %p304
      %s307 = sadd.s32 %s306, 1
      %p310 = scmp.eq.s32.totalorder %s25, 1
      %p311 = scmp.ne.s32.totalorder %s306, %s308
      %p312 = scmp.eq.s32.totalorder %s25, 0
      %p313 = por %p311, %p312
      %p314 = scmp.ne.s32.totalorder %s306, %s308
      %p315 = scmp.eq.s32.totalorder %s30, 1
      %p316 = por %p314, %p315
      %p317 = scmp.ne.s32.totalorder %s308, %s309
      %p318 = scmp.eq.s32.totalorder %s30, 0
      %p319 = por %p317, %p318
      %p320 = scmp.ne.s32.totalorder %s308, %s309
      %p321 = scmp.eq.s32.totalorder %s31, 1
      %p322 = por %p320, %p321
      %p324 = scmp.ne.s32.totalorder %s309, %s323
      %p325 = scmp.eq.s32.totalorder %s31, 0
      %p326 = por %p324, %p325
      %s328 = sadd.s32 %s327, 1
      %p331 = scmp.eq.s32.totalorder %s25, 1
      %p332 = scmp.ne.s32.totalorder %s327, %s329
      %p333 = scmp.eq.s32.totalorder %s25, 0
      %p334 = por %p332, %p333
      %p335 = scmp.ne.s32.totalorder %s327, %s329
      %p336 = scmp.eq.s32.totalorder %s30, 1
      %p337 = por %p335, %p336
      %p338 = scmp.ne.s32.totalorder %s329, %s330
      %p339 = scmp.eq.s32.totalorder %s30, 0
      %p340 = por %p338, %p339
      %p341 = scmp.ne.s32.totalorder %s329, %s330
      %p342 = scmp.eq.s32.totalorder %s31, 1
      %p343 = por %p341, %p342
      %p345 = scmp.ne.s32.totalorder %s330, %s344
      %p346 = scmp.eq.s32.totalorder %s31, 0
      %p347 = por %p345, %p346
      %s349 = sadd.s32 %s348, 1
      %p352 = scmp.eq.s32.totalorder %s25, 1
      %p353 = scmp.ne.s32.totalorder %s348, %s350
      %p354 = scmp.eq.s32.totalorder %s25, 0
      %p355 = por %p353, %p354
      %p356 = scmp.ne.s32.totalorder %s348, %s350
      %p357 = scmp.eq.s32.totalorder %s30, 1
      %p358 = por %p356, %p357
      %p359 = scmp.ne.s32.totalorder %s350, %s351
      %p360 = scmp.eq.s32.totalorder %s30, 0
      %p361 = por %p359, %p360
      %p362 = scmp.ne.s32.totalorder %s350, %s351
      %p363 = scmp.eq.s32.totalorder %s31, 1
      %p364 = por %p362, %p363
      %p366 = scmp.ne.s32.totalorder %s351, %s365
      %p367 = scmp.eq.s32.totalorder %s31, 0
      %p368 = por %p366, %p367
      %s370 = sadd.s32 %s369, 1
      %p373 = scmp.eq.s32.totalorder %s25, 1
      %p374 = scmp.ne.s32.totalorder %s369, %s371
      %p375 = scmp.eq.s32.totalorder %s25, 0
      %p376 = por %p374, %p375
      %p377 = scmp.ne.s32.totalorder %s369, %s371
      %p378 = scmp.eq.s32.totalorder %s30, 1
      %p379 = por %p377, %p378
      %p380 = scmp.ne.s32.totalorder %s371, %s372
      %p381 = scmp.eq.s32.totalorder %s30, 0
      %p382 = por %p380, %p381
      %p383 = scmp.ne.s32.totalorder %s371, %s372
      %p384 = scmp.eq.s32.totalorder %s31, 1
      %p385 = por %p383, %p384
      %p387 = scmp.ne.s32.totalorder %s372, %s386
      %p388 = scmp.eq.s32.totalorder %s31, 0
      %p389 = por %p387, %p388
      %s391 = sadd.s32 %s390, 1
      %p394 = scmp.eq.s32.totalorder %s25, 1
      %p395 = scmp.ne.s32.totalorder %s390, %s392
      %p396 = scmp.eq.s32.totalorder %s25, 0
      %p397 = por %p395, %p396
      %p398 = scmp.ne.s32.totalorder %s390, %s392
      %p399 = scmp.eq.s32.totalorder %s30, 1
      %p400 = por %p398, %p399
      %p401 = scmp.ne.s32.totalorder %s392, %s393
      %p402 = scmp.eq.s32.totalorder %s30, 0
      %p403 = por %p401, %p402
      %p404 = scmp.ne.s32.totalorder %s392, %s393
      %p405 = scmp.eq.s32.totalorder %s31, 1
      %p406 = por %p404, %p405
      %p408 = scmp.ne.s32.totalorder %s393, %s407
      %p409 = scmp.eq.s32.totalorder %s31, 0
      %p410 = por %p408, %p409
      %s412 = sadd.s32 %s411, 1
      %p415 = scmp.eq.s32.totalorder %s25, 1
      %p416 = scmp.ne.s32.totalorder %s411, %s413
      %p417 = scmp.eq.s32.totalorder %s25, 0
      %p418 = por %p416, %p417
      %p419 = scmp.ne.s32.totalorder %s411, %s413
      %p420 = scmp.eq.s32.totalorder %s30, 1
      %p421 = por %p419, %p420
      %p422 = scmp.ne.s32.totalorder %s413, %s414
      %p423 = scmp.eq.s32.totalorder %s30, 0
      %p424 = por %p422, %p423
      %p425 = scmp.ne.s32.totalorder %s413, %s414
      %p426 = scmp.eq.s32.totalorder %s31, 1
      %p427 = por %p425, %p426
      %p429 = scmp.ne.s32.totalorder %s414, %s428
      %p430 = scmp.eq.s32.totalorder %s31, 0
      %p431 = por %p429, %p430
      %p432 = scmp.le.s32.totalorder 1, %s25
      %p433 = scmp.lt.s32.totalorder %s25, 3
      %p434 = pnand %p432, %p433
      %p435 = pneg %p434
      // Predicated region
      $region9: #{joint_transformer_forward.1} parent=5 // pred_check
        _
      $region10: #{joint_transformer_forward.1} parent=5 // pred_check_branch
        %437 = sbr.rel (%p434) target = $region12
      $region11: #{joint_transformer_forward.1} parent=5 // pred_region
        %s438 = ssub.s32 %s25, 1
        // Predicated region
        $region13: #{joint_transformer_forward.1} parent=11 // pred_check
          %p439 = pneg %p46
        $region14: #{joint_transformer_forward.1} parent=11 // pred_check_branch
          %441 = sbr.rel (%p439) target = $region16
        $region15: #{joint_transformer_forward.1} parent=11 // pred_region
          _
        $region16: #{joint_transformer_forward.1} parent=11 // pred_fallthru
          _
        // Predicated region
        $region17: #{joint_transformer_forward.1} parent=11 // pred_check
          %p442 = pneg %p67
        $region18: #{joint_transformer_forward.1} parent=11 // pred_check_branch
          %444 = sbr.rel (%p442) target = $region20
        $region19: #{joint_transformer_forward.1} parent=11 // pred_region
          _
        $region20: #{joint_transformer_forward.1} parent=11 // pred_fallthru
          _
        // Predicated region
        $region21: #{joint_transformer_forward.1} parent=11 // pred_check
          %p445 = pneg %p88
        $region22: #{joint_transformer_forward.1} parent=11 // pred_check_branch
          %447 = sbr.rel (%p445) target = $region24
        $region23: #{joint_transformer_forward.1} parent=11 // pred_region
          _
        $region24: #{joint_transformer_forward.1} parent=11 // pred_fallthru
          _
        // Predicated region
        $region25: #{joint_transformer_forward.1} parent=11 // pred_check
          %p448 = pneg %p109
        $region26: #{joint_transformer_forward.1} parent=11 // pred_check_branch
          %450 = sbr.rel (%p448) target = $region28
        $region27: #{joint_transformer_forward.1} parent=11 // pred_region
          _
        $region28: #{joint_transformer_forward.1} parent=11 // pred_fallthru
          _
        // Predicated region
        $region29: #{joint_transformer_forward.1} parent=11 // pred_check
          %p451 = pneg %p130
        $region30: #{joint_transformer_forward.1} parent=11 // pred_check_branch
          %453 = sbr.rel (%p451) target = $region32
        $region31: #{joint_transformer_forward.1} parent=11 // pred_region
          _
        $region32: #{joint_transformer_forward.1} parent=11 // pred_fallthru
          _
        // Predicated region
        $region33: #{joint_transformer_forward.1} parent=11 // pred_check
          %p454 = pneg %p151
        $region34: #{joint_transformer_forward.1} parent=11 // pred_check_branch
          %456 = sbr.rel (%p454) target = $region36
        $region35: #{joint_transformer_forward.1} parent=11 // pred_region
          _
        $region36: #{joint_transformer_forward.1} parent=11 // pred_fallthru
          _
        // Predicated region
        $region37: #{joint_transformer_forward.1} parent=11 // pred_check
          %p457 = pneg %p172
        $region38: #{joint_transformer_forward.1} parent=11 // pred_check_branch
          %459 = sbr.rel (%p457) target = $region40
        $region39: #{joint_transformer_forward.1} parent=11 // pred_region
          _
        $region40: #{joint_transformer_forward.1} parent=11 // pred_fallthru
          _
        // Predicated region
        $region41: #{joint_transformer_forward.1} parent=11 // pred_check
          %p460 = pneg %p193
        $region42: #{joint_transformer_forward.1} parent=11 // pred_check_branch
          %462 = sbr.rel (%p460) target = $region44
        $region43: #{joint_transformer_forward.1} parent=11 // pred_region
          _
        $region44: #{joint_transformer_forward.1} parent=11 // pred_fallthru
          _
        // Predicated region
        $region45: #{joint_transformer_forward.1} parent=11 // pred_check
          %p463 = pneg %p214
        $region46: #{joint_transformer_forward.1} parent=11 // pred_check_branch
          %465 = sbr.rel (%p463) target = $region48
        $region47: #{joint_transformer_forward.1} parent=11 // pred_region
          _
        $region48: #{joint_transformer_forward.1} parent=11 // pred_fallthru
          _
        // Predicated region
        $region49: #{joint_transformer_forward.1} parent=11 // pred_check
          %p466 = pneg %p235
        $region50: #{joint_transformer_forward.1} parent=11 // pred_check_branch
          %468 = sbr.rel (%p466) target = $region52
        $region51: #{joint_transformer_forward.1} parent=11 // pred_region
          _
        $region52: #{joint_transformer_forward.1} parent=11 // pred_fallthru
          _
        // Predicated region
        $region53: #{joint_transformer_forward.1} parent=11 // pred_check
          %p469 = pneg %p256
        $region54: #{joint_transformer_forward.1} parent=11 // pred_check_branch
          %471 = sbr.rel (%p469) target = $region56
        $region55: #{joint_transformer_forward.1} parent=11 // pred_region
          _
        $region56: #{joint_transformer_forward.1} parent=11 // pred_fallthru
          _
        // Predicated region
        $region57: #{joint_transformer_forward.1} parent=11 // pred_check
          %p472 = pneg %p277
        $region58: #{joint_transformer_forward.1} parent=11 // pred_check_branch
          %474 = sbr.rel (%p472) target = $region60
        $region59: #{joint_transformer_forward.1} parent=11 // pred_region
          _
        $region60: #{joint_transformer_forward.1} parent=11 // pred_fallthru
          _
        // Predicated region
        $region61: #{joint_transformer_forward.1} parent=11 // pred_check
          %p475 = pneg %p298
        $region62: #{joint_transformer_forward.1} parent=11 // pred_check_branch
          %477 = sbr.rel (%p475) target = $region64
        $region63: #{joint_transformer_forward.1} parent=11 // pred_region
          _
        $region64: #{joint_transformer_forward.1} parent=11 // pred_fallthru
          _
        // Predicated region
        $region65: #{joint_transformer_forward.1} parent=11 // pred_check
          %p478 = pneg %p319
        $region66: #{joint_transformer_forward.1} parent=11 // pred_check_branch
          %480 = sbr.rel (%p478) target = $region68
        $region67: #{joint_transformer_forward.1} parent=11 // pred_region
          _
        $region68: #{joint_transformer_forward.1} parent=11 // pred_fallthru
          _
        // Predicated region
        $region69: #{joint_transformer_forward.1} parent=11 // pred_check
          %p481 = pneg %p340
        $region70: #{joint_transformer_forward.1} parent=11 // pred_check_branch
          %483 = sbr.rel (%p481) target = $region72
        $region71: #{joint_transformer_forward.1} parent=11 // pred_region
          _
        $region72: #{joint_transformer_forward.1} parent=11 // pred_fallthru
          _
        // Predicated region
        $region73: #{joint_transformer_forward.1} parent=11 // pred_check
          %p484 = pneg %p361
        $region74: #{joint_transformer_forward.1} parent=11 // pred_check_branch
          %486 = sbr.rel (%p484) target = $region76
        $region75: #{joint_transformer_forward.1} parent=11 // pred_region
          _
        $region76: #{joint_transformer_forward.1} parent=11 // pred_fallthru
          _
        // Predicated region
        $region77: #{joint_transformer_forward.1} parent=11 // pred_check
          %p487 = pneg %p382
        $region78: #{joint_transformer_forward.1} parent=11 // pred_check_branch
          %489 = sbr.rel (%p487) target = $region80
        $region79: #{joint_transformer_forward.1} parent=11 // pred_region
          _
        $region80: #{joint_transformer_forward.1} parent=11 // pred_fallthru
          _
        // Predicated region
        $region81: #{joint_transformer_forward.1} parent=11 // pred_check
          %p490 = pneg %p403
        $region82: #{joint_transformer_forward.1} parent=11 // pred_check_branch
          %492 = sbr.rel (%p490) target = $region84
        $region83: #{joint_transformer_forward.1} parent=11 // pred_region
          _
        $region84: #{joint_transformer_forward.1} parent=11 // pred_fallthru
          _
      $region12: #{joint_transformer_forward.1} parent=5 // pred_fallthru
        _
      %p493 = scmp.lt.s32.totalorder %s25, 2
      // Predicated region
      $region85: #{joint_transformer_forward.1} parent=5 // pred_check
        %p494 = pneg %p493
      $region86: #{joint_transformer_forward.1} parent=5 // pred_check_branch
        %496 = sbr.rel (%p494) target = $region88
      $region87: #{joint_transformer_forward.1} parent=5 // pred_region
        _
      $region88: #{joint_transformer_forward.1} parent=5 // pred_fallthru
        _
      %p497 = scmp.le.s32.totalorder 1, %s25
      %p498 = scmp.lt.s32.totalorder %s25, 3
      %p499 = pnand %p497, %p498
      %p500 = pneg %p499
      // Predicated region
      $region89: #{joint_transformer_forward.1} parent=5 // pred_check
        _
      $region90: #{joint_transformer_forward.1} parent=5 // pred_check_branch
        %502 = sbr.rel (%p499) target = $region92
      $region91: #{joint_transformer_forward.1} parent=5 // pred_region
        %s503 = ssub.s32 %s25, 1
        %p504 = pneg %p46
        %p505 = pneg %p43
        %p506 = pneg %p67
        %p507 = pneg %p64
        %p508 = pneg %p88
        %p509 = pneg %p85
        %p510 = pneg %p109
        %p511 = pneg %p106
        %p512 = pneg %p130
        %p513 = pneg %p127
        %p514 = pneg %p151
        %p515 = pneg %p148
        %p516 = pneg %p172
        %p517 = pneg %p169
        %p518 = pneg %p193
        %p519 = pneg %p190
        %p520 = pneg %p214
        %p521 = pneg %p211
        %p522 = pneg %p235
        %p523 = pneg %p232
        %p524 = pneg %p256
        %p525 = pneg %p253
        %p526 = pneg %p277
        %p527 = pneg %p274
        %p528 = pneg %p298
        %p529 = pneg %p295
        %p530 = pneg %p319
        %p531 = pneg %p316
        %p532 = pneg %p340
        %p533 = pneg %p337
        %p534 = pneg %p361
        %p535 = pneg %p358
        %p536 = pneg %p382
        %p537 = pneg %p379
        %p538 = pneg %p403
        %p539 = pneg %p400
        %p540 = pneg %p424
        %p541 = pneg %p421
        %p542 = scmp.eq.s32.totalorder %s30, 0
        // Predicated region
        $region93: #{joint_transformer_forward.1} parent=91 // pred_check
          %p543 = pneg %p542
        $region94: #{joint_transformer_forward.1} parent=91 // pred_check_branch
          %545 = sbr.rel (%p543) target = $region96
        $region95: #{joint_transformer_forward.1} parent=91 // pred_region
          %v546 = vld [vmem:[%s0] sm:$0xff]
          %v547 = vld [vmem:[%s0 + $0x8] sm:$0xff]
          %v548 = vld [vmem:[%s0 + $0x10] sm:$0xff]
          %v549 = vld [vmem:[%s0 + $0x18] sm:$0xff]
          %v550 = vld [vmem:[%s0 + $0x20] sm:$0xff]
          %v551 = vld [vmem:[%s0 + $0x28] sm:$0xff]
          %v552 = vld [vmem:[%s0 + $0x30] sm:$0xff]
          %v553 = vld [vmem:[%s0 + $0x38] sm:$0xff]
          %v554 = vld [vmem:[%s1] sm:$0xff]
          %v555 = vld [vmem:[%s1 + $0x8] sm:$0xff]
          %v556 = vld [vmem:[%s1 + $0x10] sm:$0xff]
          %v557 = vld [vmem:[%s1 + $0x18] sm:$0xff]
          %v558 = vld [vmem:[%s1 + $0x20] sm:$0xff]
          %v559 = vld [vmem:[%s1 + $0x28] sm:$0xff]
          %v560 = vld [vmem:[%s1 + $0x30] sm:$0xff]
          %v561 = vld [vmem:[%s1 + $0x38] sm:$0xff]
          %v562 = vld [vmem:[%s1 + $0x40] sm:$0xff]
          %v563 = vld [vmem:[%s1 + $0x48] sm:$0xff]
          %v564 = vld [vmem:[%s1 + $0x50] sm:$0xff]
          %v565 = vld [vmem:[%s1 + $0x58] sm:$0xff]
          %v566 = vld [vmem:[%s1 + $0x60] sm:$0xff]
          %v567 = vld [vmem:[%s1 + $0x68] sm:$0xff]
          %v568 = vld [vmem:[%s1 + $0x70] sm:$0xff]
          %v569 = vld [vmem:[%s1 + $0x78] sm:$0xff]
          %v570 = vld [vmem:[%s1 + $0x80] sm:$0xff]
          %v571 = vld [vmem:[%s1 + $0x88] sm:$0xff]
          %v572 = vld [vmem:[%s1 + $0x90] sm:$0xff]
          %v573 = vld [vmem:[%s1 + $0x98] sm:$0xff]
          %v574 = vld [vmem:[%s1 + $0xa0] sm:$0xff]
          %v575 = vld [vmem:[%s1 + $0xa8] sm:$0xff]
          %v576 = vld [vmem:[%s1 + $0xb0] sm:$0xff]
          %v577 = vld [vmem:[%s1 + $0xb8] sm:$0xff]
          %v578 = vld [vmem:[%s2] sm:$0x1]
          %v580 = vperm.slane %v578, 0
          %vm582 = vcmask 523264
          %v584 = vsel %vm582, %v547, 0
          %v587 = vsel %vm582, %v549, 0
          %v590 = vsel %vm582, %v551, 0
          %v593 = vsel %vm582, %v553, 0
          %595 = vmatpush.msra.mxu0 %v569
          %596 = vmatpush.msra.mxu0 %v568
          %597 = vmatpush.msra.mxu0 %v567
          %598 = vmatpush.msra.mxu0 %v566
          %599 = vmatpush.msra.mxu0 %v565
          %600 = vmatpush.msra.mxu0 %v564
          %601 = vmatpush.msra.mxu0 %v563
          %602 = vmatpush.msra.mxu0 %v562
          %603 = vmatpush.msra.mxu0 %v561
          %604 = vmatpush.msra.mxu0 %v560
          %605 = vmatpush.msra.mxu0 %v559
          %606 = vmatpush.msra.mxu0 %v558
          %607 = vmatpush.msra.mxu0 %v557
          %608 = vmatpush.msra.mxu0 %v556
          %609 = vmatpush.msra.mxu0 %v555
          %610 = vmatpush.msra.mxu0 %v554
          %611 = vmatmul.f32.gmra.mxu0 %v546
          %v612 = vpop.f32.mrf.mxu0
          %v613 = vadd.f32 %v580, %v612
          %614 = vmatmul.f32.gmra.mxu0 %v548
          %v615 = vpop.f32.mrf.mxu0
          %v616 = vadd.f32 %v580, %v615
          %617 = vmatmul.f32.gmra.mxu0 %v550
          %v618 = vpop.f32.mrf.mxu0
          %v619 = vadd.f32 %v580, %v618
          %620 = vmatmul.f32.gmra.mxu0 %v552
          %v621 = vpop.f32.mrf.mxu0
          %v622 = vadd.f32 %v580, %v621
          %623 = vdwg.mxu0
          %624 = vmatpush.msra.mxu0 0.0
          %625 = vmatpush.msra.mxu0 0.0
          %626 = vmatpush.msra.mxu0 0.0
          %627 = vmatpush.msra.mxu0 0.0
          %628 = vmatpush.msra.mxu0 0.0
          %629 = vmatpush.msra.mxu0 0.0
          %630 = vmatpush.msra.mxu0 0.0
          %631 = vmatpush.msra.mxu0 0.0
          %632 = vmatpush.msra.mxu0 %v577
          %633 = vmatpush.msra.mxu0 %v576
          %634 = vmatpush.msra.mxu0 %v575
          %635 = vmatpush.msra.mxu0 %v574
          %636 = vmatpush.msra.mxu0 %v573
          %637 = vmatpush.msra.mxu0 %v572
          %638 = vmatpush.msra.mxu0 %v571
          %639 = vmatpush.msra.mxu0 %v570
          %640 = vmatmul.f32.gmra.mxu0 %v584
          %v641 = vpop.f32.mrf.mxu0
          %v642 = vadd.f32 %v613, %v641
          %643 = vmatmul.f32.gmra.mxu0 %v587
          %v644 = vpop.f32.mrf.mxu0
          %v645 = vadd.f32 %v616, %v644
          %646 = vmatmul.f32.gmra.mxu0 %v590
          %v647 = vpop.f32.mrf.mxu0
          %v648 = vadd.f32 %v619, %v647
          %649 = vmatmul.f32.gmra.mxu0 %v593
          %v650 = vpop.f32.mrf.mxu0
          %v651 = vadd.f32 %v622, %v650
          %652 = vdwg.mxu0
          %v653 = vld [vmem:[%s3] sm:$0xff]
          %v654 = vld [vmem:[%s3 + $0x8] sm:$0xff]
          %v655 = vadd.f32 %v642, %v653
          %v656 = vadd.f32 %v645, %v654
          %v657 = vadd.f32 %v648, %v653
          %v658 = vadd.f32 %v651, %v654
          %vm659 = vcmask 261120
          %660 = vst.msk [vmem:[#allocation2] sm:$0xff] %vm659, %v655
          %661 = vst.msk [vmem:[#allocation2 + $0x8] sm:$0xff] %vm659, %v656
          %662 = vst.msk [vmem:[#allocation2 + $0x10] sm:$0xff] %vm659, %v657
          %663 = vst.msk [vmem:[#allocation2 + $0x18] sm:$0xff] %vm659, %v658
        $region96: #{joint_transformer_forward.1} parent=91 // pred_fallthru
          _
        %v664 = vld [vmem:[#allocation2] sm:$0xff]
        %v665 = vld [vmem:[#allocation2 + $0x8] sm:$0xff]
        %v666 = vld [vmem:[#allocation2 + $0x10] sm:$0xff]
        %v667 = vld [vmem:[#allocation2 + $0x18] sm:$0xff]
        %s668 = scalar_lea.vmem %s8, %s30
        %v669 = vld [vmem:[%s668] sm:$0x1]
        %s670 = scalar_lea.vmem %s9, %s30
        %v671 = vld [vmem:[%s670] sm:$0x1]
        %vm672 = vcmask 261120
        %v673 = vsel %vm672, %v664, 0.0
        %674 = vadd.xlane.f32.xlu0 %v673
        %v675 = vpop.xlane.xlu0 %674
        %v676 = vsel %vm672, %v665, 0.0
        %677 = vadd.xlane.f32.xlu0 %v676
        %v678 = vpop.xlane.xlu0 %677
        %v679 = vsel %vm672, %v666, 0.0
        %680 = vadd.xlane.f32.xlu0 %v679
        %v681 = vpop.xlane.xlu0 %680
        %v682 = vsel %vm672, %v667, 0.0
        %683 = vadd.xlane.f32.xlu0 %v682
        %v684 = vpop.xlane.xlu0 %683
        %v685 = vrcp.pop 32.0
        %v686 = vmul.f32 32.0, %v685
        %v687 = vsub.f32 1.0, %v686
        %v688 = vmul.f32 %v685, %v687
        %v689 = vadd.f32 %v685, %v688
        %vm690 = vweird.f32 %v685
        %v691 = vsel %vm690, %v685, %v689
        %v692 = vmul.f32 %v675, %v691
        %v693 = vmul.f32 %v678, %v691
        %v694 = vmul.f32 %v681, %v691
        %v695 = vmul.f32 %v684, %v691
        %v696 = vsub.f32 %v664, %v692
        %v697 = vsub.f32 %v665, %v693
        %v698 = vsub.f32 %v666, %v694
        %v699 = vsub.f32 %v667, %v695
        %v700 = vmul.f32 %v696, %v696
        %v701 = vmul.f32 %v697, %v697
        %v702 = vmul.f32 %v698, %v698
        %v703 = vmul.f32 %v699, %v699
        %v704 = vsel %vm672, %v700, 0.0
        %705 = vadd.xlane.f32.xlu0 %v704
        %v706 = vpop.xlane.xlu0 %705
        %v707 = vsel %vm672, %v701, 0.0
        %708 = vadd.xlane.f32.xlu0 %v707
        %v709 = vpop.xlane.xlu0 %708
        %v710 = vsel %vm672, %v702, 0.0
        %711 = vadd.xlane.f32.xlu0 %v710
        %v712 = vpop.xlane.xlu0 %711
        %v713 = vsel %vm672, %v703, 0.0
        %714 = vadd.xlane.f32.xlu0 %v713
        %v715 = vpop.xlane.xlu0 %714
        %v716 = vmul.f32 %v706, %v691
        %v717 = vmul.f32 %v709, %v691
        %v718 = vmul.f32 %v712, %v691
        %v719 = vmul.f32 %v715, %v691
        %v720 = vadd.f32 %v716, 1e-06
        %v721 = vadd.f32 %v717, 1e-06
        %v722 = vadd.f32 %v718, 1e-06
        %v723 = vadd.f32 %v719, 1e-06
        %v724 = vrsqrt.pop %v720
        %v725 = vmul.f32 %v724, %v720
        %v726 = vmul.f32 %v725, %v724
        %v727 = vmul.f32 0.5, %v726
        %v728 = vsub.f32 1.5, %v727
        %v729 = vmul.f32 %v724, %v728
        %vm730 = vweird.f32 %v720
        %vm731 = vweird.f32 %v724
        %vm732 = vmor %vm730, %vm731
        %v733 = vsel %vm732, %v724, %v729
        %v734 = vrsqrt.pop %v721
        %v735 = vmul.f32 %v734, %v721
        %v736 = vmul.f32 %v735, %v734
        %v737 = vmul.f32 0.5, %v736
        %v738 = vsub.f32 1.5, %v737
        %v739 = vmul.f32 %v734, %v738
        %vm740 = vweird.f32 %v721
        %vm741 = vweird.f32 %v734
        %vm742 = vmor %vm740, %vm741
        %v743 = vsel %vm742, %v734, %v739
        %v744 = vrsqrt.pop %v722
        %v745 = vmul.f32 %v744, %v722
        %v746 = vmul.f32 %v745, %v744
        %v747 = vmul.f32 0.5, %v746
        %v748 = vsub.f32 1.5, %v747
        %v749 = vmul.f32 %v744, %v748
        %vm750 = vweird.f32 %v722
        %vm751 = vweird.f32 %v744
        %vm752 = vmor %vm750, %vm751
        %v753 = vsel %vm752, %v744, %v749
        %v754 = vrsqrt.pop %v723
        %v755 = vmul.f32 %v754, %v723
        %v756 = vmul.f32 %v755, %v754
        %v757 = vmul.f32 0.5, %v756
        %v758 = vsub.f32 1.5, %v757
        %v759 = vmul.f32 %v754, %v758
        %vm760 = vweird.f32 %v723
        %vm761 = vweird.f32 %v754
        %vm762 = vmor %vm760, %vm761
        %v763 = vsel %vm762, %v754, %v759
        %v764 = vmul.f32 %v696, %v733
        %v765 = vmul.f32 %v697, %v743
        %v766 = vmul.f32 %v698, %v753
        %v767 = vmul.f32 %v699, %v763
        %v769 = vperm.slane %v669, 0
        %v771 = vmul.f32 %v764, %v769
        %v772 = vmul.f32 %v765, %v769
        %v773 = vmul.f32 %v766, %v769
        %v774 = vmul.f32 %v767, %v769
        %v776 = vperm.slane %v671, 0
        %v778 = vadd.f32 %v771, %v776
        %v779 = vadd.f32 %v772, %v776
        %v780 = vadd.f32 %v773, %v776
        %v781 = vadd.f32 %v774, %v776
        %s782 = smul.u32 %s30, 32
        %s783 = scalar_lea.vmem %s4, %s782
        %v784 = vld [vmem:[%s783] sm:$0xff]
        %v785 = vld [vmem:[%s783 + $0x8] sm:$0xff]
        %v786 = vld [vmem:[%s783 + $0x10] sm:$0xff]
        %v787 = vld [vmem:[%s783 + $0x18] sm:$0xff]
        %s788 = scalar_lea.vmem %s5, %s30
        %v789 = vld [vmem:[%s788] sm:$0x1]
        %v791 = vperm.slane %v789, 0
        %v794 = vsel %vm672, %v778, 0
        %v797 = vsel %vm672, %v779, 0
        %v800 = vsel %vm672, %v780, 0
        %v803 = vsel %vm672, %v781, 0
        %805 = vmatpush.msra.mxu0 0.0
        %806 = vmatpush.msra.mxu0 0.0
        %807 = vmatpush.msra.mxu0 0.0
        %808 = vmatpush.msra.mxu0 0.0
        %809 = vmatpush.msra.mxu0 0.0
        %810 = vmatpush.msra.mxu0 0.0
        %811 = vmatpush.msra.mxu0 0.0
        %812 = vmatpush.msra.mxu0 0.0
        %813 = vmatpush.msra.mxu0 0.0
        %814 = vmatpush.msra.mxu0 0.0
        %815 = vmatpush.msra.mxu0 0.0
        %816 = vmatpush.msra.mxu0 0.0
        %817 = vmatpush.msra.mxu0 %v787
        %818 = vmatpush.msra.mxu0 %v786
        %819 = vmatpush.msra.mxu0 %v785
        %820 = vmatpush.msra.mxu0 %v784
        %821 = vmatmul.f32.gmra.mxu0 %v794
        %v822 = vpop.f32.mrf.mxu0
        %v823 = vadd.f32 %v791, %v822
        %824 = vmatmul.f32.gmra.mxu0 %v797
        %v825 = vpop.f32.mrf.mxu0
        %v826 = vadd.f32 %v791, %v825
        %827 = vmatmul.f32.gmra.mxu0 %v800
        %v828 = vpop.f32.mrf.mxu0
        %v829 = vadd.f32 %v791, %v828
        %830 = vmatmul.f32.gmra.mxu0 %v803
        %v831 = vpop.f32.mrf.mxu0
        %v832 = vadd.f32 %v791, %v831
        %833 = vdwg.mxu0
        %836 = vrot.lane.b32.xlu0 %v823, 96
        %v837 = vpop.permute.xlu0 %836
        %838 = vrot.lane.b32.xlu0 %v826, 96
        %v839 = vpop.permute.xlu0 %838
        %vm840 = vcmask 64512
        %v841 = vsel %vm840, %v823, 0
        %v843 = vsel %vm840, %v826, 0
        %v845 = vsel %vm840, %v837, 0
        %v847 = vsel %vm840, %v839, 0
        %849 = vmatpush.xpose.msra.mxu0 0.0
        %850 = vmatpush.xpose.msra.mxu0 0.0
        %851 = vmatpush.xpose.msra.mxu0 0.0
        %852 = vmatpush.xpose.msra.mxu0 0.0
        %853 = vmatpush.xpose.msra.mxu0 0.0
        %854 = vmatpush.xpose.msra.mxu0 0.0
        %855 = vmatpush.xpose.msra.mxu0 0.0
        %856 = vmatpush.xpose.msra.mxu0 0.0
        %857 = vmatpush.xpose.msra.mxu0 0.0
        %858 = vmatpush.xpose.msra.mxu0 0.0
        %859 = vmatpush.xpose.msra.mxu0 0.0
        %860 = vmatpush.xpose.msra.mxu0 0.0
        %861 = vmatpush.xpose.msra.mxu0 0.0
        %862 = vmatpush.xpose.msra.mxu0 0.0
        %863 = vmatpush.xpose.msra.mxu0 %v847
        %864 = vmatpush.xpose.msra.mxu0 %v845
        %865 = vmatmul.f32.gmra.mxu0 %v841
        %v866 = vpop.f32.mrf.mxu0
        %v867 = vadd.f32 0.0, %v866
        %868 = vmatmul.f32.gmra.mxu0 %v843
        %v869 = vpop.f32.mrf.mxu0
        %v870 = vadd.f32 0.0, %v869
        %871 = vdwg.mxu0
        %874 = vrot.lane.b32.xlu0 %v829, 96
        %v875 = vpop.permute.xlu0 %874
        %876 = vrot.lane.b32.xlu0 %v832, 96
        %v877 = vpop.permute.xlu0 %876
        %v878 = vsel %vm840, %v829, 0
        %v880 = vsel %vm840, %v832, 0
        %v882 = vsel %vm840, %v875, 0
        %v884 = vsel %vm840, %v877, 0
        %886 = vmatpush.xpose.msra.mxu0 0.0
        %887 = vmatpush.xpose.msra.mxu0 0.0
        %888 = vmatpush.xpose.msra.mxu0 0.0
        %889 = vmatpush.xpose.msra.mxu0 0.0
        %890 = vmatpush.xpose.msra.mxu0 0.0
        %891 = vmatpush.xpose.msra.mxu0 0.0
        %892 = vmatpush.xpose.msra.mxu0 0.0
        %893 = vmatpush.xpose.msra.mxu0 0.0
        %894 = vmatpush.xpose.msra.mxu0 0.0
        %895 = vmatpush.xpose.msra.mxu0 0.0
        %896 = vmatpush.xpose.msra.mxu0 0.0
        %897 = vmatpush.xpose.msra.mxu0 0.0
        %898 = vmatpush.xpose.msra.mxu0 0.0
        %899 = vmatpush.xpose.msra.mxu0 0.0
        %900 = vmatpush.xpose.msra.mxu0 %v884
        %901 = vmatpush.xpose.msra.mxu0 %v882
        %902 = vmatmul.f32.gmra.mxu0 %v878
        %v903 = vpop.f32.mrf.mxu0
        %v904 = vadd.f32 0.0, %v903
        %905 = vmatmul.f32.gmra.mxu0 %v880
        %v906 = vpop.f32.mrf.mxu0
        %v907 = vadd.f32 0.0, %v906
        %908 = vdwg.mxu0
        %vm909 = vcmask 130048
        %v910 = vsel %vm909, %v867, -inf
        %911 = vmax.xlane.f32.xlu0 %v910
        %v912 = vpop.xlane.xlu0 %911
        %v913 = vsel %vm909, %v870, -inf
        %914 = vmax.xlane.f32.xlu0 %v913
        %v915 = vpop.xlane.xlu0 %914
        %v916 = vsel %vm909, %v904, -inf
        %917 = vmax.xlane.f32.xlu0 %v916
        %v918 = vpop.xlane.xlu0 %917
        %v919 = vsel %vm909, %v907, -inf
        %920 = vmax.xlane.f32.xlu0 %v919
        %v921 = vpop.xlane.xlu0 %920
        %v922 = vsub.f32 %v867, %v912
        %v923 = vsub.f32 %v870, %v915
        %v924 = vsub.f32 %v904, %v918
        %v925 = vsub.f32 %v907, %v921
        %v926 = vmul.f32 %v922, 1.442695
        %v927 = vpow.pop %v926
        %v928 = vmul.f32 %v923, 1.442695
        %v929 = vpow.pop %v928
        %v930 = vmul.f32 %v924, 1.442695
        %v931 = vpow.pop %v930
        %v932 = vmul.f32 %v925, 1.442695
        %v933 = vpow.pop %v932
        %v934 = vsel %vm909, %v927, 0.0
        %935 = vadd.xlane.f32.xlu0 %v934
        %v936 = vpop.xlane.xlu0 %935
        %v937 = vsel %vm909, %v929, 0.0
        %938 = vadd.xlane.f32.xlu0 %v937
        %v939 = vpop.xlane.xlu0 %938
        %v940 = vsel %vm909, %v931, 0.0
        %941 = vadd.xlane.f32.xlu0 %v940
        %v942 = vpop.xlane.xlu0 %941
        %v943 = vsel %vm909, %v933, 0.0
        %944 = vadd.xlane.f32.xlu0 %v943
        %v945 = vpop.xlane.xlu0 %944
        %v946 = vrcp.pop %v936
        %v947 = vrcp.pop %v939
        %v948 = vrcp.pop %v942
        %v949 = vrcp.pop %v945
        %v950 = vmul.f32 %v927, %v946
        %v951 = vmul.f32 %v929, %v947
        %v952 = vmul.f32 %v931, %v948
        %v953 = vmul.f32 %v933, %v949
        %954 = vrot.lane.b32.xlu0 %v823, 64
        %v955 = vpop.permute.xlu0 %954
        %956 = vrot.lane.b32.xlu0 %v826, 64
        %v957 = vpop.permute.xlu0 %956
        %v961 = vsel %vm909, %v950, 0
        %v964 = vsel %vm909, %v951, 0
        %966 = vmatpush.msra.mxu0 0.0
        %967 = vmatpush.msra.mxu0 0.0
        %968 = vmatpush.msra.mxu0 0.0
        %969 = vmatpush.msra.mxu0 0.0
        %970 = vmatpush.msra.mxu0 0.0
        %971 = vmatpush.msra.mxu0 0.0
        %972 = vmatpush.msra.mxu0 0.0
        %973 = vmatpush.msra.mxu0 0.0
        %974 = vmatpush.msra.mxu0 0.0
        %975 = vmatpush.msra.mxu0 0.0
        %976 = vmatpush.msra.mxu0 0.0
        %977 = vmatpush.msra.mxu0 0.0
        %978 = vmatpush.msra.mxu0 0.0
        %979 = vmatpush.msra.mxu0 0.0
        %980 = vmatpush.msra.mxu0 %v957
        %981 = vmatpush.msra.mxu0 %v955
        %982 = vmatmul.f32.gmra.mxu0 %v961
        %v983 = vpop.f32.mrf.mxu0
        %v984 = vadd.f32 0.0, %v983
        %985 = vmatmul.f32.gmra.mxu0 %v964
        %v986 = vpop.f32.mrf.mxu0
        %v987 = vadd.f32 0.0, %v986
        %988 = vdwg.mxu0
        %989 = vrot.lane.b32.xlu0 %v829, 64
        %v990 = vpop.permute.xlu0 %989
        %991 = vrot.lane.b32.xlu0 %v832, 64
        %v992 = vpop.permute.xlu0 %991
        %v996 = vsel %vm909, %v952, 0
        %v999 = vsel %vm909, %v953, 0
        %1001 = vmatpush.msra.mxu0 0.0
        %1002 = vmatpush.msra.mxu0 0.0
        %1003 = vmatpush.msra.mxu0 0.0
        %1004 = vmatpush.msra.mxu0 0.0
        %1005 = vmatpush.msra.mxu0 0.0
        %1006 = vmatpush.msra.mxu0 0.0
        %1007 = vmatpush.msra.mxu0 0.0
        %1008 = vmatpush.msra.mxu0 0.0
        %1009 = vmatpush.msra.mxu0 0.0
        %1010 = vmatpush.msra.mxu0 0.0
        %1011 = vmatpush.msra.mxu0 0.0
        %1012 = vmatpush.msra.mxu0 0.0
        %1013 = vmatpush.msra.mxu0 0.0
        %1014 = vmatpush.msra.mxu0 0.0
        %1015 = vmatpush.msra.mxu0 %v992
        %1016 = vmatpush.msra.mxu0 %v990
        %1017 = vmatmul.f32.gmra.mxu0 %v996
        %v1018 = vpop.f32.mrf.mxu0
        %v1019 = vadd.f32 0.0, %v1018
        %1020 = vmatmul.f32.gmra.mxu0 %v999
        %v1021 = vpop.f32.mrf.mxu0
        %v1022 = vadd.f32 0.0, %v1021
        %1023 = vdwg.mxu0
        %1024 = vrot.lane.b32.xlu0 %v823, 120
        %v1025 = vpop.permute.xlu0 %1024
        %1026 = vrot.lane.b32.xlu0 %v826, 120
        %v1027 = vpop.permute.xlu0 %1026
        %1028 = vrot.lane.b32.xlu0 %v823, 88
        %v1029 = vpop.permute.xlu0 %1028
        %1030 = vrot.lane.b32.xlu0 %v826, 88
        %v1031 = vpop.permute.xlu0 %1030
        %v1032 = vsel %vm840, %v1025, 0
        %v1034 = vsel %vm840, %v1027, 0
        %v1036 = vsel %vm840, %v1029, 0
        %v1038 = vsel %vm840, %v1031, 0
        %1040 = vmatpush.xpose.msra.mxu0 0.0
        %1041 = vmatpush.xpose.msra.mxu0 0.0
        %1042 = vmatpush.xpose.msra.mxu0 0.0
        %1043 = vmatpush.xpose.msra.mxu0 0.0
        %1044 = vmatpush.xpose.msra.mxu0 0.0
        %1045 = vmatpush.xpose.msra.mxu0 0.0
        %1046 = vmatpush.xpose.msra.mxu0 0.0
        %1047 = vmatpush.xpose.msra.mxu0 0.0
        %1048 = vmatpush.xpose.msra.mxu0 0.0
        %1049 = vmatpush.xpose.msra.mxu0 0.0
        %1050 = vmatpush.xpose.msra.mxu0 0.0
        %1051 = vmatpush.xpose.msra.mxu0 0.0
        %1052 = vmatpush.xpose.msra.mxu0 0.0
        %1053 = vmatpush.xpose.msra.mxu0 0.0
        %1054 = vmatpush.xpose.msra.mxu0 %v1038
        %1055 = vmatpush.xpose.msra.mxu0 %v1036
        %1056 = vmatmul.f32.gmra.mxu0 %v1032
        %v1057 = vpop.f32.mrf.mxu0
        %v1058 = vadd.f32 0.0, %v1057
        %1059 = vmatmul.f32.gmra.mxu0 %v1034
        %v1060 = vpop.f32.mrf.mxu0
        %v1061 = vadd.f32 0.0, %v1060
        %1062 = vdwg.mxu0
        %1063 = vrot.lane.b32.xlu0 %v829, 120
        %v1064 = vpop.permute.xlu0 %1063
        %1065 = vrot.lane.b32.xlu0 %v832, 120
        %v1066 = vpop.permute.xlu0 %1065
        %1067 = vrot.lane.b32.xlu0 %v829, 88
        %v1068 = vpop.permute.xlu0 %1067
        %1069 = vrot.lane.b32.xlu0 %v832, 88
        %v1070 = vpop.permute.xlu0 %1069
        %v1071 = vsel %vm840, %v1064, 0
        %v1073 = vsel %vm840, %v1066, 0
        %v1075 = vsel %vm840, %v1068, 0
        %v1077 = vsel %vm840, %v1070, 0
        %1079 = vmatpush.xpose.msra.mxu0 0.0
        %1080 = vmatpush.xpose.msra.mxu0 0.0
        %1081 = vmatpush.xpose.msra.mxu0 0.0
        %1082 = vmatpush.xpose.msra.mxu0 0.0
        %1083 = vmatpush.xpose.msra.mxu0 0.0
        %1084 = vmatpush.xpose.msra.mxu0 0.0
        %1085 = vmatpush.xpose.msra.mxu0 0.0
        %1086 = vmatpush.xpose.msra.mxu0 0.0
        %1087 = vmatpush.xpose.msra.mxu0 0.0
        %1088 = vmatpush.xpose.msra.mxu0 0.0
        %1089 = vmatpush.xpose.msra.mxu0 0.0
        %1090 = vmatpush.xpose.msra.mxu0 0.0
        %1091 = vmatpush.xpose.msra.mxu0 0.0
        %1092 = vmatpush.xpose.msra.mxu0 0.0
        %1093 = vmatpush.xpose.msra.mxu0 %v1077
        %1094 = vmatpush.xpose.msra.mxu0 %v1075
        %1095 = vmatmul.f32.gmra.mxu0 %v1071
        %v1096 = vpop.f32.mrf.mxu0
        %v1097 = vadd.f32 0.0, %v1096
        %1098 = vmatmul.f32.gmra.mxu0 %v1073
        %v1099 = vpop.f32.mrf.mxu0
        %v1100 = vadd.f32 0.0, %v1099
        %1101 = vdwg.mxu0
        %v1102 = vsel %vm909, %v1058, -inf
        %1103 = vmax.xlane.f32.xlu0 %v1102
        %v1104 = vpop.xlane.xlu0 %1103
        %v1105 = vsel %vm909, %v1061, -inf
        %1106 = vmax.xlane.f32.xlu0 %v1105
        %v1107 = vpop.xlane.xlu0 %1106
        %v1108 = vsel %vm909, %v1097, -inf
        %1109 = vmax.xlane.f32.xlu0 %v1108
        %v1110 = vpop.xlane.xlu0 %1109
        %v1111 = vsel %vm909, %v1100, -inf
        %1112 = vmax.xlane.f32.xlu0 %v1111
        %v1113 = vpop.xlane.xlu0 %1112
        %v1114 = vsub.f32 %v1058, %v1104
        %v1115 = vsub.f32 %v1061, %v1107
        %v1116 = vsub.f32 %v1097, %v1110
        %v1117 = vsub.f32 %v1100, %v1113
        %v1118 = vmul.f32 %v1114, 1.442695
        %v1119 = vpow.pop %v1118
        %v1120 = vmul.f32 %v1115, 1.442695
        %v1121 = vpow.pop %v1120
        %v1122 = vmul.f32 %v1116, 1.442695
        %v1123 = vpow.pop %v1122
        %v1124 = vmul.f32 %v1117, 1.442695
        %v1125 = vpow.pop %v1124
        %v1126 = vsel %vm909, %v1119, 0.0
        %1127 = vadd.xlane.f32.xlu0 %v1126
        %v1128 = vpop.xlane.xlu0 %1127
        %v1129 = vsel %vm909, %v1121, 0.0
        %1130 = vadd.xlane.f32.xlu0 %v1129
        %v1131 = vpop.xlane.xlu0 %1130
        %v1132 = vsel %vm909, %v1123, 0.0
        %1133 = vadd.xlane.f32.xlu0 %v1132
        %v1134 = vpop.xlane.xlu0 %1133
        %v1135 = vsel %vm909, %v1125, 0.0
        %1136 = vadd.xlane.f32.xlu0 %v1135
        %v1137 = vpop.xlane.xlu0 %1136
        %v1138 = vrcp.pop %v1128
        %v1139 = vrcp.pop %v1131
        %v1140 = vrcp.pop %v1134
        %v1141 = vrcp.pop %v1137
        %v1142 = vmul.f32 %v1119, %v1138
        %v1143 = vmul.f32 %v1121, %v1139
        %v1144 = vmul.f32 %v1123, %v1140
        %v1145 = vmul.f32 %v1125, %v1141
        %1146 = vrot.lane.b32.xlu0 %v823, 56
        %v1147 = vpop.permute.xlu0 %1146
        %1148 = vrot.lane.b32.xlu0 %v826, 56
        %v1149 = vpop.permute.xlu0 %1148
        %v1153 = vsel %vm909, %v1142, 0
        %v1156 = vsel %vm909, %v1143, 0
        %1158 = vmatpush.msra.mxu0 0.0
        %1159 = vmatpush.msra.mxu0 0.0
        %1160 = vmatpush.msra.mxu0 0.0
        %1161 = vmatpush.msra.mxu0 0.0
        %1162 = vmatpush.msra.mxu0 0.0
        %1163 = vmatpush.msra.mxu0 0.0
        %1164 = vmatpush.msra.mxu0 0.0
        %1165 = vmatpush.msra.mxu0 0.0
        %1166 = vmatpush.msra.mxu0 0.0
        %1167 = vmatpush.msra.mxu0 0.0
        %1168 = vmatpush.msra.mxu0 0.0
        %1169 = vmatpush.msra.mxu0 0.0
        %1170 = vmatpush.msra.mxu0 0.0
        %1171 = vmatpush.msra.mxu0 0.0
        %1172 = vmatpush.msra.mxu0 %v1149
        %1173 = vmatpush.msra.mxu0 %v1147
        %1174 = vmatmul.f32.gmra.mxu0 %v1153
        %v1175 = vpop.f32.mrf.mxu0
        %v1176 = vadd.f32 0.0, %v1175
        %1177 = vmatmul.f32.gmra.mxu0 %v1156
        %v1178 = vpop.f32.mrf.mxu0
        %v1179 = vadd.f32 0.0, %v1178
        %1180 = vdwg.mxu0
        %1181 = vrot.lane.b32.xlu0 %v829, 56
        %v1182 = vpop.permute.xlu0 %1181
        %1183 = vrot.lane.b32.xlu0 %v832, 56
        %v1184 = vpop.permute.xlu0 %1183
        %v1188 = vsel %vm909, %v1144, 0
        %v1191 = vsel %vm909, %v1145, 0
        %1193 = vmatpush.msra.mxu0 0.0
        %1194 = vmatpush.msra.mxu0 0.0
        %1195 = vmatpush.msra.mxu0 0.0
        %1196 = vmatpush.msra.mxu0 0.0
        %1197 = vmatpush.msra.mxu0 0.0
        %1198 = vmatpush.msra.mxu0 0.0
        %1199 = vmatpush.msra.mxu0 0.0
        %1200 = vmatpush.msra.mxu0 0.0
        %1201 = vmatpush.msra.mxu0 0.0
        %1202 = vmatpush.msra.mxu0 0.0
        %1203 = vmatpush.msra.mxu0 0.0
        %1204 = vmatpush.msra.mxu0 0.0
        %1205 = vmatpush.msra.mxu0 0.0
        %1206 = vmatpush.msra.mxu0 0.0
        %1207 = vmatpush.msra.mxu0 %v1184
        %1208 = vmatpush.msra.mxu0 %v1182
        %1209 = vmatmul.f32.gmra.mxu0 %v1188
        %v1210 = vpop.f32.mrf.mxu0
        %v1211 = vadd.f32 0.0, %v1210
        %1212 = vmatmul.f32.gmra.mxu0 %v1191
        %v1213 = vpop.f32.mrf.mxu0
        %v1214 = vadd.f32 0.0, %v1213
        %1215 = vdwg.mxu0
        %1216 = vrot.lane.b32.xlu0 %v823, 112
        %v1217 = vpop.permute.xlu0 %1216
        %1218 = vrot.lane.b32.xlu0 %v826, 112
        %v1219 = vpop.permute.xlu0 %1218
        %1220 = vrot.lane.b32.xlu0 %v823, 80
        %v1221 = vpop.permute.xlu0 %1220
        %1222 = vrot.lane.b32.xlu0 %v826, 80
        %v1223 = vpop.permute.xlu0 %1222
        %v1224 = vsel %vm840, %v1217, 0
        %v1226 = vsel %vm840, %v1219, 0
        %v1228 = vsel %vm840, %v1221, 0
        %v1230 = vsel %vm840, %v1223, 0
        %1232 = vmatpush.xpose.msra.mxu0 0.0
        %1233 = vmatpush.xpose.msra.mxu0 0.0
        %1234 = vmatpush.xpose.msra.mxu0 0.0
        %1235 = vmatpush.xpose.msra.mxu0 0.0
        %1236 = vmatpush.xpose.msra.mxu0 0.0
        %1237 = vmatpush.xpose.msra.mxu0 0.0
        %1238 = vmatpush.xpose.msra.mxu0 0.0
        %1239 = vmatpush.xpose.msra.mxu0 0.0
        %1240 = vmatpush.xpose.msra.mxu0 0.0
        %1241 = vmatpush.xpose.msra.mxu0 0.0
        %1242 = vmatpush.xpose.msra.mxu0 0.0
        %1243 = vmatpush.xpose.msra.mxu0 0.0
        %1244 = vmatpush.xpose.msra.mxu0 0.0
        %1245 = vmatpush.xpose.msra.mxu0 0.0
        %1246 = vmatpush.xpose.msra.mxu0 %v1230
        %1247 = vmatpush.xpose.msra.mxu0 %v1228
        %1248 = vmatmul.f32.gmra.mxu0 %v1224
        %v1249 = vpop.f32.mrf.mxu0
        %v1250 = vadd.f32 0.0, %v1249
        %1251 = vmatmul.f32.gmra.mxu0 %v1226
        %v1252 = vpop.f32.mrf.mxu0
        %v1253 = vadd.f32 0.0, %v1252
        %1254 = vdwg.mxu0
        %1255 = vrot.lane.b32.xlu0 %v829, 112
        %v1256 = vpop.permute.xlu0 %1255
        %1257 = vrot.lane.b32.xlu0 %v832, 112
        %v1258 = vpop.permute.xlu0 %1257
        %1259 = vrot.lane.b32.xlu0 %v829, 80
        %v1260 = vpop.permute.xlu0 %1259
        %1261 = vrot.lane.b32.xlu0 %v832, 80
        %v1262 = vpop.permute.xlu0 %1261
        %v1263 = vsel %vm840, %v1256, 0
        %v1265 = vsel %vm840, %v1258, 0
        %v1267 = vsel %vm840, %v1260, 0
        %v1269 = vsel %vm840, %v1262, 0
        %1271 = vmatpush.xpose.msra.mxu0 0.0
        %1272 = vmatpush.xpose.msra.mxu0 0.0
        %1273 = vmatpush.xpose.msra.mxu0 0.0
        %1274 = vmatpush.xpose.msra.mxu0 0.0
        %1275 = vmatpush.xpose.msra.mxu0 0.0
        %1276 = vmatpush.xpose.msra.mxu0 0.0
        %1277 = vmatpush.xpose.msra.mxu0 0.0
        %1278 = vmatpush.xpose.msra.mxu0 0.0
        %1279 = vmatpush.xpose.msra.mxu0 0.0
        %1280 = vmatpush.xpose.msra.mxu0 0.0
        %1281 = vmatpush.xpose.msra.mxu0 0.0
        %1282 = vmatpush.xpose.msra.mxu0 0.0
        %1283 = vmatpush.xpose.msra.mxu0 0.0
        %1284 = vmatpush.xpose.msra.mxu0 0.0
        %1285 = vmatpush.xpose.msra.mxu0 %v1269
        %1286 = vmatpush.xpose.msra.mxu0 %v1267
        %1287 = vmatmul.f32.gmra.mxu0 %v1263
        %v1288 = vpop.f32.mrf.mxu0
        %v1289 = vadd.f32 0.0, %v1288
        %1290 = vmatmul.f32.gmra.mxu0 %v1265
        %v1291 = vpop.f32.mrf.mxu0
        %v1292 = vadd.f32 0.0, %v1291
        %1293 = vdwg.mxu0
        %v1294 = vsel %vm909, %v1250, -inf
        %1295 = vmax.xlane.f32.xlu0 %v1294
        %v1296 = vpop.xlane.xlu0 %1295
        %v1297 = vsel %vm909, %v1253, -inf
        %1298 = vmax.xlane.f32.xlu0 %v1297
        %v1299 = vpop.xlane.xlu0 %1298
        %v1300 = vsel %vm909, %v1289, -inf
        %1301 = vmax.xlane.f32.xlu0 %v1300
        %v1302 = vpop.xlane.xlu0 %1301
        %v1303 = vsel %vm909, %v1292, -inf
        %1304 = vmax.xlane.f32.xlu0 %v1303
        %v1305 = vpop.xlane.xlu0 %1304
        %v1306 = vsub.f32 %v1250, %v1296
        %v1307 = vsub.f32 %v1253, %v1299
        %v1308 = vsub.f32 %v1289, %v1302
        %v1309 = vsub.f32 %v1292, %v1305
        %v1310 = vmul.f32 %v1306, 1.442695
        %v1311 = vpow.pop %v1310
        %v1312 = vmul.f32 %v1307, 1.442695
        %v1313 = vpow.pop %v1312
        %v1314 = vmul.f32 %v1308, 1.442695
        %v1315 = vpow.pop %v1314
        %v1316 = vmul.f32 %v1309, 1.442695
        %v1317 = vpow.pop %v1316
        %v1318 = vsel %vm909, %v1311, 0.0
        %1319 = vadd.xlane.f32.xlu0 %v1318
        %v1320 = vpop.xlane.xlu0 %1319
        %v1321 = vsel %vm909, %v1313, 0.0
        %1322 = vadd.xlane.f32.xlu0 %v1321
        %v1323 = vpop.xlane.xlu0 %1322
        %v1324 = vsel %vm909, %v1315, 0.0
        %1325 = vadd.xlane.f32.xlu0 %v1324
        %v1326 = vpop.xlane.xlu0 %1325
        %v1327 = vsel %vm909, %v1317, 0.0
        %1328 = vadd.xlane.f32.xlu0 %v1327
        %v1329 = vpop.xlane.xlu0 %1328
        %v1330 = vrcp.pop %v1320
        %v1331 = vrcp.pop %v1323
        %v1332 = vrcp.pop %v1326
        %v1333 = vrcp.pop %v1329
        %v1334 = vmul.f32 %v1311, %v1330
        %v1335 = vmul.f32 %v1313, %v1331
        %v1336 = vmul.f32 %v1315, %v1332
        %v1337 = vmul.f32 %v1317, %v1333
        %1338 = vrot.lane.b32.xlu0 %v823, 48
        %v1339 = vpop.permute.xlu0 %1338
        %1340 = vrot.lane.b32.xlu0 %v826, 48
        %v1341 = vpop.permute.xlu0 %1340
        %v1345 = vsel %vm909, %v1334, 0
        %v1348 = vsel %vm909, %v1335, 0
        %1350 = vmatpush.msra.mxu0 0.0
        %1351 = vmatpush.msra.mxu0 0.0
        %1352 = vmatpush.msra.mxu0 0.0
        %1353 = vmatpush.msra.mxu0 0.0
        %1354 = vmatpush.msra.mxu0 0.0
        %1355 = vmatpush.msra.mxu0 0.0
        %1356 = vmatpush.msra.mxu0 0.0
        %1357 = vmatpush.msra.mxu0 0.0
        %1358 = vmatpush.msra.mxu0 0.0
        %1359 = vmatpush.msra.mxu0 0.0
        %1360 = vmatpush.msra.mxu0 0.0
        %1361 = vmatpush.msra.mxu0 0.0
        %1362 = vmatpush.msra.mxu0 0.0
        %1363 = vmatpush.msra.mxu0 0.0
        %1364 = vmatpush.msra.mxu0 %v1341
        %1365 = vmatpush.msra.mxu0 %v1339
        %1366 = vmatmul.f32.gmra.mxu0 %v1345
        %v1367 = vpop.f32.mrf.mxu0
        %v1368 = vadd.f32 0.0, %v1367
        %1369 = vmatmul.f32.gmra.mxu0 %v1348
        %v1370 = vpop.f32.mrf.mxu0
        %v1371 = vadd.f32 0.0, %v1370
        %1372 = vdwg.mxu0
        %1373 = vrot.lane.b32.xlu0 %v829, 48
        %v1374 = vpop.permute.xlu0 %1373
        %1375 = vrot.lane.b32.xlu0 %v832, 48
        %v1376 = vpop.permute.xlu0 %1375
        %v1380 = vsel %vm909, %v1336, 0
        %v1383 = vsel %vm909, %v1337, 0
        %1385 = vmatpush.msra.mxu0 0.0
        %1386 = vmatpush.msra.mxu0 0.0
        %1387 = vmatpush.msra.mxu0 0.0
        %1388 = vmatpush.msra.mxu0 0.0
        %1389 = vmatpush.msra.mxu0 0.0
        %1390 = vmatpush.msra.mxu0 0.0
        %1391 = vmatpush.msra.mxu0 0.0
        %1392 = vmatpush.msra.mxu0 0.0
        %1393 = vmatpush.msra.mxu0 0.0
        %1394 = vmatpush.msra.mxu0 0.0
        %1395 = vmatpush.msra.mxu0 0.0
        %1396 = vmatpush.msra.mxu0 0.0
        %1397 = vmatpush.msra.mxu0 0.0
        %1398 = vmatpush.msra.mxu0 0.0
        %1399 = vmatpush.msra.mxu0 %v1376
        %1400 = vmatpush.msra.mxu0 %v1374
        %1401 = vmatmul.f32.gmra.mxu0 %v1380
        %v1402 = vpop.f32.mrf.mxu0
        %v1403 = vadd.f32 0.0, %v1402
        %1404 = vmatmul.f32.gmra.mxu0 %v1383
        %v1405 = vpop.f32.mrf.mxu0
        %v1406 = vadd.f32 0.0, %v1405
        %1407 = vdwg.mxu0
        %1408 = vrot.lane.b32.xlu0 %v823, 104
        %v1409 = vpop.permute.xlu0 %1408
        %1410 = vrot.lane.b32.xlu0 %v826, 104
        %v1411 = vpop.permute.xlu0 %1410
        %1412 = vrot.lane.b32.xlu0 %v823, 72
        %v1413 = vpop.permute.xlu0 %1412
        %1414 = vrot.lane.b32.xlu0 %v826, 72
        %v1415 = vpop.permute.xlu0 %1414
        %v1416 = vsel %vm840, %v1409, 0
        %v1418 = vsel %vm840, %v1411, 0
        %v1420 = vsel %vm840, %v1413, 0
        %v1422 = vsel %vm840, %v1415, 0
        %1424 = vmatpush.xpose.msra.mxu0 0.0
        %1425 = vmatpush.xpose.msra.mxu0 0.0
        %1426 = vmatpush.xpose.msra.mxu0 0.0
        %1427 = vmatpush.xpose.msra.mxu0 0.0
        %1428 = vmatpush.xpose.msra.mxu0 0.0
        %1429 = vmatpush.xpose.msra.mxu0 0.0
        %1430 = vmatpush.xpose.msra.mxu0 0.0
        %1431 = vmatpush.xpose.msra.mxu0 0.0
        %1432 = vmatpush.xpose.msra.mxu0 0.0
        %1433 = vmatpush.xpose.msra.mxu0 0.0
        %1434 = vmatpush.xpose.msra.mxu0 0.0
        %1435 = vmatpush.xpose.msra.mxu0 0.0
        %1436 = vmatpush.xpose.msra.mxu0 0.0
        %1437 = vmatpush.xpose.msra.mxu0 0.0
        %1438 = vmatpush.xpose.msra.mxu0 %v1422
        %1439 = vmatpush.xpose.msra.mxu0 %v1420
        %1440 = vmatmul.f32.gmra.mxu0 %v1416
        %v1441 = vpop.f32.mrf.mxu0
        %v1442 = vadd.f32 0.0, %v1441
        %1443 = vmatmul.f32.gmra.mxu0 %v1418
        %v1444 = vpop.f32.mrf.mxu0
        %v1445 = vadd.f32 0.0, %v1444
        %1446 = vdwg.mxu0
        %1447 = vrot.lane.b32.xlu0 %v829, 104
        %v1448 = vpop.permute.xlu0 %1447
        %1449 = vrot.lane.b32.xlu0 %v832, 104
        %v1450 = vpop.permute.xlu0 %1449
        %1451 = vrot.lane.b32.xlu0 %v829, 72
        %v1452 = vpop.permute.xlu0 %1451
        %1453 = vrot.lane.b32.xlu0 %v832, 72
        %v1454 = vpop.permute.xlu0 %1453
        %v1455 = vsel %vm840, %v1448, 0
        %v1457 = vsel %vm840, %v1450, 0
        %v1459 = vsel %vm840, %v1452, 0
        %v1461 = vsel %vm840, %v1454, 0
        %1463 = vmatpush.xpose.msra.mxu0 0.0
        %1464 = vmatpush.xpose.msra.mxu0 0.0
        %1465 = vmatpush.xpose.msra.mxu0 0.0
        %1466 = vmatpush.xpose.msra.mxu0 0.0
        %1467 = vmatpush.xpose.msra.mxu0 0.0
        %1468 = vmatpush.xpose.msra.mxu0 0.0
        %1469 = vmatpush.xpose.msra.mxu0 0.0
        %1470 = vmatpush.xpose.msra.mxu0 0.0
        %1471 = vmatpush.xpose.msra.mxu0 0.0
        %1472 = vmatpush.xpose.msra.mxu0 0.0
        %1473 = vmatpush.xpose.msra.mxu0 0.0
        %1474 = vmatpush.xpose.msra.mxu0 0.0
        %1475 = vmatpush.xpose.msra.mxu0 0.0
        %1476 = vmatpush.xpose.msra.mxu0 0.0
        %1477 = vmatpush.xpose.msra.mxu0 %v1461
        %1478 = vmatpush.xpose.msra.mxu0 %v1459
        %1479 = vmatmul.f32.gmra.mxu0 %v1455
        %v1480 = vpop.f32.mrf.mxu0
        %v1481 = vadd.f32 0.0, %v1480
        %1482 = vmatmul.f32.gmra.mxu0 %v1457
        %v1483 = vpop.f32.mrf.mxu0
        %v1484 = vadd.f32 0.0, %v1483
        %1485 = vdwg.mxu0
        %v1486 = vsel %vm909, %v1442, -inf
        %1487 = vmax.xlane.f32.xlu0 %v1486
        %v1488 = vpop.xlane.xlu0 %1487
        %v1489 = vsel %vm909, %v1445, -inf
        %1490 = vmax.xlane.f32.xlu0 %v1489
        %v1491 = vpop.xlane.xlu0 %1490
        %v1492 = vsel %vm909, %v1481, -inf
        %1493 = vmax.xlane.f32.xlu0 %v1492
        %v1494 = vpop.xlane.xlu0 %1493
        %v1495 = vsel %vm909, %v1484, -inf
        %1496 = vmax.xlane.f32.xlu0 %v1495
        %v1497 = vpop.xlane.xlu0 %1496
        %v1498 = vsub.f32 %v1442, %v1488
        %v1499 = vsub.f32 %v1445, %v1491
        %v1500 = vsub.f32 %v1481, %v1494
        %v1501 = vsub.f32 %v1484, %v1497
        %v1502 = vmul.f32 %v1498, 1.442695
        %v1503 = vpow.pop %v1502
        %v1504 = vmul.f32 %v1499, 1.442695
        %v1505 = vpow.pop %v1504
        %v1506 = vmul.f32 %v1500, 1.442695
        %v1507 = vpow.pop %v1506
        %v1508 = vmul.f32 %v1501, 1.442695
        %v1509 = vpow.pop %v1508
        %v1510 = vsel %vm909, %v1503, 0.0
        %1511 = vadd.xlane.f32.xlu0 %v1510
        %v1512 = vpop.xlane.xlu0 %1511
        %v1513 = vsel %vm909, %v1505, 0.0
        %1514 = vadd.xlane.f32.xlu0 %v1513
        %v1515 = vpop.xlane.xlu0 %1514
        %v1516 = vsel %vm909, %v1507, 0.0
        %1517 = vadd.xlane.f32.xlu0 %v1516
        %v1518 = vpop.xlane.xlu0 %1517
        %v1519 = vsel %vm909, %v1509, 0.0
        %1520 = vadd.xlane.f32.xlu0 %v1519
        %v1521 = vpop.xlane.xlu0 %1520
        %v1522 = vrcp.pop %v1512
        %v1523 = vrcp.pop %v1515
        %v1524 = vrcp.pop %v1518
        %v1525 = vrcp.pop %v1521
        %v1526 = vmul.f32 %v1503, %v1522
        %v1527 = vmul.f32 %v1505, %v1523
        %v1528 = vmul.f32 %v1507, %v1524
        %v1529 = vmul.f32 %v1509, %v1525
        %1530 = vrot.lane.b32.xlu0 %v823, 40
        %v1531 = vpop.permute.xlu0 %1530
        %1532 = vrot.lane.b32.xlu0 %v826, 40
        %v1533 = vpop.permute.xlu0 %1532
        %v1537 = vsel %vm909, %v1526, 0
        %v1540 = vsel %vm909, %v1527, 0
        %1542 = vmatpush.msra.mxu0 0.0
        %1543 = vmatpush.msra.mxu0 0.0
        %1544 = vmatpush.msra.mxu0 0.0
        %1545 = vmatpush.msra.mxu0 0.0
        %1546 = vmatpush.msra.mxu0 0.0
        %1547 = vmatpush.msra.mxu0 0.0
        %1548 = vmatpush.msra.mxu0 0.0
        %1549 = vmatpush.msra.mxu0 0.0
        %1550 = vmatpush.msra.mxu0 0.0
        %1551 = vmatpush.msra.mxu0 0.0
        %1552 = vmatpush.msra.mxu0 0.0
        %1553 = vmatpush.msra.mxu0 0.0
        %1554 = vmatpush.msra.mxu0 0.0
        %1555 = vmatpush.msra.mxu0 0.0
        %1556 = vmatpush.msra.mxu0 %v1533
        %1557 = vmatpush.msra.mxu0 %v1531
        %1558 = vmatmul.f32.gmra.mxu0 %v1537
        %v1559 = vpop.f32.mrf.mxu0
        %v1560 = vadd.f32 0.0, %v1559
        %1561 = vmatmul.f32.gmra.mxu0 %v1540
        %v1562 = vpop.f32.mrf.mxu0
        %v1563 = vadd.f32 0.0, %v1562
        %1564 = vdwg.mxu0
        %1565 = vrot.lane.b32.xlu0 %v829, 40
        %v1566 = vpop.permute.xlu0 %1565
        %1567 = vrot.lane.b32.xlu0 %v832, 40
        %v1568 = vpop.permute.xlu0 %1567
        %v1572 = vsel %vm909, %v1528, 0
        %v1575 = vsel %vm909, %v1529, 0
        %1577 = vmatpush.msra.mxu0 0.0
        %1578 = vmatpush.msra.mxu0 0.0
        %1579 = vmatpush.msra.mxu0 0.0
        %1580 = vmatpush.msra.mxu0 0.0
        %1581 = vmatpush.msra.mxu0 0.0
        %1582 = vmatpush.msra.mxu0 0.0
        %1583 = vmatpush.msra.mxu0 0.0
        %1584 = vmatpush.msra.mxu0 0.0
        %1585 = vmatpush.msra.mxu0 0.0
        %1586 = vmatpush.msra.mxu0 0.0
        %1587 = vmatpush.msra.mxu0 0.0
        %1588 = vmatpush.msra.mxu0 0.0
        %1589 = vmatpush.msra.mxu0 0.0
        %1590 = vmatpush.msra.mxu0 0.0
        %1591 = vmatpush.msra.mxu0 %v1568
        %1592 = vmatpush.msra.mxu0 %v1566
        %1593 = vmatmul.f32.gmra.mxu0 %v1572
        %v1594 = vpop.f32.mrf.mxu0
        %v1595 = vadd.f32 0.0, %v1594
        %1596 = vmatmul.f32.gmra.mxu0 %v1575
        %v1597 = vpop.f32.mrf.mxu0
        %v1598 = vadd.f32 0.0, %v1597
        %1599 = vdwg.mxu0
        %1604 = vrot.lane.b32.xlu0 %v1176, 8
        %v1605 = vpop.permute.xlu0 %1604
        %1606 = vrot.lane.b32.xlu0 %v1179, 8
        %v1607 = vpop.permute.xlu0 %1606
        %1608 = vrot.lane.b32.xlu0 %v1211, 8
        %v1609 = vpop.permute.xlu0 %1608
        %1610 = vrot.lane.b32.xlu0 %v1214, 8
        %v1611 = vpop.permute.xlu0 %1610
        %1620 = vrot.lane.b32.xlu0 %v1368, 16
        %v1621 = vpop.permute.xlu0 %1620
        %1622 = vrot.lane.b32.xlu0 %v1371, 16
        %v1623 = vpop.permute.xlu0 %1622
        %1624 = vrot.lane.b32.xlu0 %v1403, 16
        %v1625 = vpop.permute.xlu0 %1624
        %1626 = vrot.lane.b32.xlu0 %v1406, 16
        %v1627 = vpop.permute.xlu0 %1626
        %1636 = vrot.lane.b32.xlu0 %v1560, 24
        %v1637 = vpop.permute.xlu0 %1636
        %1638 = vrot.lane.b32.xlu0 %v1563, 24
        %v1639 = vpop.permute.xlu0 %1638
        %1640 = vrot.lane.b32.xlu0 %v1595, 24
        %v1641 = vpop.permute.xlu0 %1640
        %1642 = vrot.lane.b32.xlu0 %v1598, 24
        %v1643 = vpop.permute.xlu0 %1642
        %v1648 = vsel %vm840, %v984, %v1605
        %v1649 = vsel %vm840, %v987, %v1607
        %v1650 = vsel %vm840, %v1019, %v1609
        %v1651 = vsel %vm840, %v1022, %v1611
        %v1652 = vsel %vm909, %v1648, %v1621
        %v1653 = vsel %vm909, %v1649, %v1623
        %v1654 = vsel %vm909, %v1650, %v1625
        %v1655 = vsel %vm909, %v1651, %v1627
        %vm1656 = vcmask 195584
        %v1657 = vsel %vm1656, %v1652, %v1637
        %v1658 = vsel %vm1656, %v1653, %v1639
        %v1659 = vsel %vm1656, %v1654, %v1641
        %v1660 = vsel %vm1656, %v1655, %v1643
        %s1661 = scalar_lea.vmem %s6, %s782
        %v1662 = vld [vmem:[%s1661] sm:$0xff]
        %v1663 = vld [vmem:[%s1661 + $0x8] sm:$0xff]
        %v1664 = vld [vmem:[%s1661 + $0x10] sm:$0xff]
        %v1665 = vld [vmem:[%s1661 + $0x18] sm:$0xff]
        %s1666 = scalar_lea.vmem %s7, %s30
        %v1667 = vld [vmem:[%s1666] sm:$0x1]
        %v1669 = vperm.slane %v1667, 0
        %v1672 = vsel %vm672, %v1657, 0
        %v1675 = vsel %vm672, %v1658, 0
        %v1678 = vsel %vm672, %v1659, 0
        %v1681 = vsel %vm672, %v1660, 0
        %1683 = vmatpush.msra.mxu0 0.0
        %1684 = vmatpush.msra.mxu0 0.0
        %1685 = vmatpush.msra.mxu0 0.0
        %1686 = vmatpush.msra.mxu0 0.0
        %1687 = vmatpush.msra.mxu0 0.0
        %1688 = vmatpush.msra.mxu0 0.0
        %1689 = vmatpush.msra.mxu0 0.0
        %1690 = vmatpush.msra.mxu0 0.0
        %1691 = vmatpush.msra.mxu0 0.0
        %1692 = vmatpush.msra.mxu0 0.0
        %1693 = vmatpush.msra.mxu0 0.0
        %1694 = vmatpush.msra.mxu0 0.0
        %1695 = vmatpush.msra.mxu0 %v1665
        %1696 = vmatpush.msra.mxu0 %v1664
        %1697 = vmatpush.msra.mxu0 %v1663
        %1698 = vmatpush.msra.mxu0 %v1662
        %1699 = vmatmul.f32.gmra.mxu0 %v1672
        %v1700 = vpop.f32.mrf.mxu0
        %v1701 = vadd.f32 %v1669, %v1700
        %1702 = vmatmul.f32.gmra.mxu0 %v1675
        %v1703 = vpop.f32.mrf.mxu0
        %v1704 = vadd.f32 %v1669, %v1703
        %1705 = vmatmul.f32.gmra.mxu0 %v1678
        %v1706 = vpop.f32.mrf.mxu0
        %v1707 = vadd.f32 %v1669, %v1706
        %1708 = vmatmul.f32.gmra.mxu0 %v1681
        %v1709 = vpop.f32.mrf.mxu0
        %v1710 = vadd.f32 %v1669, %v1709
        %1711 = vdwg.mxu0
        %v1712 = vadd.f32 %v664, %v1701
        %v1713 = vadd.f32 %v665, %v1704
        %v1714 = vadd.f32 %v666, %v1707
        %v1715 = vadd.f32 %v667, %v1710
        %s1716 = scalar_lea.vmem %s10, %s30
        %v1717 = vld [vmem:[%s1716] sm:$0x1]
        %s1718 = scalar_lea.vmem %s11, %s30
        %v1719 = vld [vmem:[%s1718] sm:$0x1]
        %v1720 = vsel %vm672, %v1712, 0.0
        %1721 = vadd.xlane.f32.xlu0 %v1720
        %v1722 = vpop.xlane.xlu0 %1721
        %v1723 = vsel %vm672, %v1713, 0.0
        %1724 = vadd.xlane.f32.xlu0 %v1723
        %v1725 = vpop.xlane.xlu0 %1724
        %v1726 = vsel %vm672, %v1714, 0.0
        %1727 = vadd.xlane.f32.xlu0 %v1726
        %v1728 = vpop.xlane.xlu0 %1727
        %v1729 = vsel %vm672, %v1715, 0.0
        %1730 = vadd.xlane.f32.xlu0 %v1729
        %v1731 = vpop.xlane.xlu0 %1730
        %v1732 = vmul.f32 %v1722, %v691
        %v1733 = vmul.f32 %v1725, %v691
        %v1734 = vmul.f32 %v1728, %v691
        %v1735 = vmul.f32 %v1731, %v691
        %v1736 = vsub.f32 %v1712, %v1732
        %v1737 = vsub.f32 %v1713, %v1733
        %v1738 = vsub.f32 %v1714, %v1734
        %v1739 = vsub.f32 %v1715, %v1735
        %v1740 = vmul.f32 %v1736, %v1736
        %v1741 = vmul.f32 %v1737, %v1737
        %v1742 = vmul.f32 %v1738, %v1738
        %v1743 = vmul.f32 %v1739, %v1739
        %v1744 = vsel %vm672, %v1740, 0.0
        %1745 = vadd.xlane.f32.xlu0 %v1744
        %v1746 = vpop.xlane.xlu0 %1745
        %v1747 = vsel %vm672, %v1741, 0.0
        %1748 = vadd.xlane.f32.xlu0 %v1747
        %v1749 = vpop.xlane.xlu0 %1748
        %v1750 = vsel %vm672, %v1742, 0.0
        %1751 = vadd.xlane.f32.xlu0 %v1750
        %v1752 = vpop.xlane.xlu0 %1751
        %v1753 = vsel %vm672, %v1743, 0.0
        %1754 = vadd.xlane.f32.xlu0 %v1753
        %v1755 = vpop.xlane.xlu0 %1754
        %v1756 = vmul.f32 %v1746, %v691
        %v1757 = vmul.f32 %v1749, %v691
        %v1758 = vmul.f32 %v1752, %v691
        %v1759 = vmul.f32 %v1755, %v691
        %v1760 = vadd.f32 %v1756, 1e-06
        %v1761 = vadd.f32 %v1757, 1e-06
        %v1762 = vadd.f32 %v1758, 1e-06
        %v1763 = vadd.f32 %v1759, 1e-06
        %v1764 = vrsqrt.pop %v1760
        %v1765 = vmul.f32 %v1764, %v1760
        %v1766 = vmul.f32 %v1765, %v1764
        %v1767 = vmul.f32 0.5, %v1766
        %v1768 = vsub.f32 1.5, %v1767
        %v1769 = vmul.f32 %v1764, %v1768
        %vm1770 = vweird.f32 %v1760
        %vm1771 = vweird.f32 %v1764
        %vm1772 = vmor %vm1770, %vm1771
        %v1773 = vsel %vm1772, %v1764, %v1769
        %v1774 = vrsqrt.pop %v1761
        %v1775 = vmul.f32 %v1774, %v1761
        %v1776 = vmul.f32 %v1775, %v1774
        %v1777 = vmul.f32 0.5, %v1776
        %v1778 = vsub.f32 1.5, %v1777
        %v1779 = vmul.f32 %v1774, %v1778
        %vm1780 = vweird.f32 %v1761
        %vm1781 = vweird.f32 %v1774
        %vm1782 = vmor %vm1780, %vm1781
        %v1783 = vsel %vm1782, %v1774, %v1779
        %v1784 = vrsqrt.pop %v1762
        %v1785 = vmul.f32 %v1784, %v1762
        %v1786 = vmul.f32 %v1785, %v1784
        %v1787 = vmul.f32 0.5, %v1786
        %v1788 = vsub.f32 1.5, %v1787
        %v1789 = vmul.f32 %v1784, %v1788
        %vm1790 = vweird.f32 %v1762
        %vm1791 = vweird.f32 %v1784
        %vm1792 = vmor %vm1790, %vm1791
        %v1793 = vsel %vm1792, %v1784, %v1789
        %v1794 = vrsqrt.pop %v1763
        %v1795 = vmul.f32 %v1794, %v1763
        %v1796 = vmul.f32 %v1795, %v1794
        %v1797 = vmul.f32 0.5, %v1796
        %v1798 = vsub.f32 1.5, %v1797
        %v1799 = vmul.f32 %v1794, %v1798
        %vm1800 = vweird.f32 %v1763
        %vm1801 = vweird.f32 %v1794
        %vm1802 = vmor %vm1800, %vm1801
        %v1803 = vsel %vm1802, %v1794, %v1799
        %v1804 = vmul.f32 %v1736, %v1773
        %v1805 = vmul.f32 %v1737, %v1783
        %v1806 = vmul.f32 %v1738, %v1793
        %v1807 = vmul.f32 %v1739, %v1803
        %v1809 = vperm.slane %v1717, 0
        %v1811 = vmul.f32 %v1804, %v1809
        %v1812 = vmul.f32 %v1805, %v1809
        %v1813 = vmul.f32 %v1806, %v1809
        %v1814 = vmul.f32 %v1807, %v1809
        %v1816 = vperm.slane %v1719, 0
        %v1818 = vadd.f32 %v1811, %v1816
        %v1819 = vadd.f32 %v1812, %v1816
        %v1820 = vadd.f32 %v1813, %v1816
        %v1821 = vadd.f32 %v1814, %v1816
        %s1822 = scalar_lea.vmem %s12, %s782
        %v1823 = vld [vmem:[%s1822] sm:$0xff]
        %v1824 = vld [vmem:[%s1822 + $0x8] sm:$0xff]
        %v1825 = vld [vmem:[%s1822 + $0x10] sm:$0xff]
        %v1826 = vld [vmem:[%s1822 + $0x18] sm:$0xff]
        %s1827 = scalar_lea.vmem %s13, %s30
        %v1828 = vld [vmem:[%s1827] sm:$0x1]
        %v1830 = vperm.slane %v1828, 0
        %v1833 = vsel %vm672, %v1818, 0
        %v1836 = vsel %vm672, %v1819, 0
        %v1839 = vsel %vm672, %v1820, 0
        %v1842 = vsel %vm672, %v1821, 0
        %1844 = vmatpush.msra.mxu0 0.0
        %1845 = vmatpush.msra.mxu0 0.0
        %1846 = vmatpush.msra.mxu0 0.0
        %1847 = vmatpush.msra.mxu0 0.0
        %1848 = vmatpush.msra.mxu0 0.0
        %1849 = vmatpush.msra.mxu0 0.0
        %1850 = vmatpush.msra.mxu0 0.0
        %1851 = vmatpush.msra.mxu0 0.0
        %1852 = vmatpush.msra.mxu0 0.0
        %1853 = vmatpush.msra.mxu0 0.0
        %1854 = vmatpush.msra.mxu0 0.0
        %1855 = vmatpush.msra.mxu0 0.0
        %1856 = vmatpush.msra.mxu0 %v1826
        %1857 = vmatpush.msra.mxu0 %v1825
        %1858 = vmatpush.msra.mxu0 %v1824
        %1859 = vmatpush.msra.mxu0 %v1823
        %1860 = vmatmul.f32.gmra.mxu0 %v1833
        %v1861 = vpop.f32.mrf.mxu0
        %v1862 = vadd.f32 %v1830, %v1861
        %1863 = vmatmul.f32.gmra.mxu0 %v1836
        %v1864 = vpop.f32.mrf.mxu0
        %v1865 = vadd.f32 %v1830, %v1864
        %1866 = vmatmul.f32.gmra.mxu0 %v1839
        %v1867 = vpop.f32.mrf.mxu0
        %v1868 = vadd.f32 %v1830, %v1867
        %1869 = vmatmul.f32.gmra.mxu0 %v1842
        %v1870 = vpop.f32.mrf.mxu0
        %v1871 = vadd.f32 %v1830, %v1870
        %1872 = vdwg.mxu0
        %v1873 = vmul.f32 %v1862, 0.5
        %v1874 = vmul.f32 %v1865, 0.5
        %v1875 = vmul.f32 %v1868, 0.5
        %v1876 = vmul.f32 %v1871, 0.5
        %v1877 = vmul.f32 %v1862, 0.044715
        %v1878 = vmul.f32 %v1865, 0.044715
        %v1879 = vmul.f32 %v1868, 0.044715
        %v1880 = vmul.f32 %v1871, 0.044715
        %v1881 = vmul.f32 %v1877, %v1862
        %v1882 = vmul.f32 %v1878, %v1865
        %v1883 = vmul.f32 %v1879, %v1868
        %v1884 = vmul.f32 %v1880, %v1871
        %v1885 = vmul.f32 %v1881, %v1862
        %v1886 = vmul.f32 %v1882, %v1865
        %v1887 = vmul.f32 %v1883, %v1868
        %v1888 = vmul.f32 %v1884, %v1871
        %v1889 = vadd.f32 %v1862, %v1885
        %v1890 = vadd.f32 %v1865, %v1886
        %v1891 = vadd.f32 %v1868, %v1887
        %v1892 = vadd.f32 %v1871, %v1888
        %v1893 = vmul.f32 %v1889, 0.7978846
        %v1894 = vmul.f32 %v1890, 0.7978846
        %v1895 = vmul.f32 %v1891, 0.7978846
        %v1896 = vmul.f32 %v1892, 0.7978846
        %v1897 = vtanh.pop %v1893
        %v1898 = vtanh.pop %v1894
        %v1899 = vtanh.pop %v1895
        %v1900 = vtanh.pop %v1896
        %v1901 = vadd.f32 %v1897, 1.0
        %v1902 = vadd.f32 %v1898, 1.0
        %v1903 = vadd.f32 %v1899, 1.0
        %v1904 = vadd.f32 %v1900, 1.0
        %v1905 = vmul.f32 %v1873, %v1901
        %v1906 = vmul.f32 %v1874, %v1902
        %v1907 = vmul.f32 %v1875, %v1903
        %v1908 = vmul.f32 %v1876, %v1904
        %s1909 = smul.u32 %s30, 128
        %s1910 = scalar_lea.vmem %s14, %s1909
        %v1911 = vld [vmem:[%s1910] sm:$0xff]
        %v1912 = vld [vmem:[%s1910 + $0x8] sm:$0xff]
        %v1913 = vld [vmem:[%s1910 + $0x10] sm:$0xff]
        %v1914 = vld [vmem:[%s1910 + $0x18] sm:$0xff]
        %v1915 = vld [vmem:[%s1910 + $0x20] sm:$0xff]
        %v1916 = vld [vmem:[%s1910 + $0x28] sm:$0xff]
        %v1917 = vld [vmem:[%s1910 + $0x30] sm:$0xff]
        %v1918 = vld [vmem:[%s1910 + $0x38] sm:$0xff]
        %v1919 = vld [vmem:[%s1910 + $0x40] sm:$0xff]
        %v1920 = vld [vmem:[%s1910 + $0x48] sm:$0xff]
        %v1921 = vld [vmem:[%s1910 + $0x50] sm:$0xff]
        %v1922 = vld [vmem:[%s1910 + $0x58] sm:$0xff]
        %v1923 = vld [vmem:[%s1910 + $0x60] sm:$0xff]
        %v1924 = vld [vmem:[%s1910 + $0x68] sm:$0xff]
        %v1925 = vld [vmem:[%s1910 + $0x70] sm:$0xff]
        %v1926 = vld [vmem:[%s1910 + $0x78] sm:$0xff]
        %s1927 = scalar_lea.vmem %s15, %s30
        %v1928 = vld [vmem:[%s1927] sm:$0x1]
        %v1930 = vperm.slane %v1928, 0
        %1932 = vmatpush.msra.mxu0 %v1926
        %1933 = vmatpush.msra.mxu0 %v1925
        %1934 = vmatpush.msra.mxu0 %v1924
        %1935 = vmatpush.msra.mxu0 %v1923
        %1936 = vmatpush.msra.mxu0 %v1922
        %1937 = vmatpush.msra.mxu0 %v1921
        %1938 = vmatpush.msra.mxu0 %v1920
        %1939 = vmatpush.msra.mxu0 %v1919
        %1940 = vmatpush.msra.mxu0 %v1918
        %1941 = vmatpush.msra.mxu0 %v1917
        %1942 = vmatpush.msra.mxu0 %v1916
        %1943 = vmatpush.msra.mxu0 %v1915
        %1944 = vmatpush.msra.mxu0 %v1914
        %1945 = vmatpush.msra.mxu0 %v1913
        %1946 = vmatpush.msra.mxu0 %v1912
        %1947 = vmatpush.msra.mxu0 %v1911
        %1948 = vmatmul.f32.gmra.mxu0 %v1905
        %v1949 = vpop.f32.mrf.mxu0
        %v1950 = vadd.f32 %v1930, %v1949
        %1951 = vmatmul.f32.gmra.mxu0 %v1906
        %v1952 = vpop.f32.mrf.mxu0
        %v1953 = vadd.f32 %v1930, %v1952
        %1954 = vmatmul.f32.gmra.mxu0 %v1907
        %v1955 = vpop.f32.mrf.mxu0
        %v1956 = vadd.f32 %v1930, %v1955
        %1957 = vmatmul.f32.gmra.mxu0 %v1908
        %v1958 = vpop.f32.mrf.mxu0
        %v1959 = vadd.f32 %v1930, %v1958
        %1960 = vdwg.mxu0
        %v1961 = vadd.f32 %v1712, %v1950
        %v1962 = vadd.f32 %v1713, %v1953
        %v1963 = vadd.f32 %v1714, %v1956
        %v1964 = vadd.f32 %v1715, %v1959
        %1965 = vst.msk [vmem:[#allocation2] sm:$0xff] %vm672, %v1961
        %1966 = vst.msk [vmem:[#allocation2 + $0x8] sm:$0xff] %vm672, %v1962
        %1967 = vst.msk [vmem:[#allocation2 + $0x10] sm:$0xff] %vm672, %v1963
        %1968 = vst.msk [vmem:[#allocation2 + $0x18] sm:$0xff] %vm672, %v1964
        %p1969 = scmp.eq.s32.totalorder %s30, 1
        // Predicated region
        $region97: #{joint_transformer_forward.1} parent=91 // pred_check
          %p1970 = pneg %p1969
        $region98: #{joint_transformer_forward.1} parent=91 // pred_check_branch
          %1972 = sbr.rel (%p1970) target = $region100
        $region99: #{joint_transformer_forward.1} parent=91 // pred_region
          %v1973 = vld [vmem:[#allocation2] sm:$0xff]
          %v1974 = vld [vmem:[#allocation2 + $0x8] sm:$0xff]
          %v1975 = vld [vmem:[#allocation2 + $0x10] sm:$0xff]
          %v1976 = vld [vmem:[#allocation2 + $0x18] sm:$0xff]
          %v1977 = vld [vmem:[%s16] sm:$0x1]
          %v1978 = vld [vmem:[%s17] sm:$0x1]
          %v1979 = vsel %vm672, %v1973, 0.0
          %1980 = vadd.xlane.f32.xlu0 %v1979
          %v1981 = vpop.xlane.xlu0 %1980
          %v1982 = vsel %vm672, %v1974, 0.0
          %1983 = vadd.xlane.f32.xlu0 %v1982
          %v1984 = vpop.xlane.xlu0 %1983
          %v1985 = vsel %vm672, %v1975, 0.0
          %1986 = vadd.xlane.f32.xlu0 %v1985
          %v1987 = vpop.xlane.xlu0 %1986
          %v1988 = vsel %vm672, %v1976, 0.0
          %1989 = vadd.xlane.f32.xlu0 %v1988
          %v1990 = vpop.xlane.xlu0 %1989
          %v1991 = vmul.f32 %v1981, %v691
          %v1992 = vmul.f32 %v1984, %v691
          %v1993 = vmul.f32 %v1987, %v691
          %v1994 = vmul.f32 %v1990, %v691
          %v1995 = vsub.f32 %v1973, %v1991
          %v1996 = vsub.f32 %v1974, %v1992
          %v1997 = vsub.f32 %v1975, %v1993
          %v1998 = vsub.f32 %v1976, %v1994
          %v1999 = vmul.f32 %v1995, %v1995
          %v2000 = vmul.f32 %v1996, %v1996
          %v2001 = vmul.f32 %v1997, %v1997
          %v2002 = vmul.f32 %v1998, %v1998
          %v2003 = vsel %vm672, %v1999, 0.0
          %2004 = vadd.xlane.f32.xlu0 %v2003
          %v2005 = vpop.xlane.xlu0 %2004
          %v2006 = vsel %vm672, %v2000, 0.0
          %2007 = vadd.xlane.f32.xlu0 %v2006
          %v2008 = vpop.xlane.xlu0 %2007
          %v2009 = vsel %vm672, %v2001, 0.0
          %2010 = vadd.xlane.f32.xlu0 %v2009
          %v2011 = vpop.xlane.xlu0 %2010
          %v2012 = vsel %vm672, %v2002, 0.0
          %2013 = vadd.xlane.f32.xlu0 %v2012
          %v2014 = vpop.xlane.xlu0 %2013
          %v2015 = vmul.f32 %v2005, %v691
          %v2016 = vmul.f32 %v2008, %v691
          %v2017 = vmul.f32 %v2011, %v691
          %v2018 = vmul.f32 %v2014, %v691
          %v2019 = vadd.f32 %v2015, 1e-06
          %v2020 = vadd.f32 %v2016, 1e-06
          %v2021 = vadd.f32 %v2017, 1e-06
          %v2022 = vadd.f32 %v2018, 1e-06
          %v2023 = vrsqrt.pop %v2019
          %v2024 = vmul.f32 %v2023, %v2019
          %v2025 = vmul.f32 %v2024, %v2023
          %v2026 = vmul.f32 0.5, %v2025
          %v2027 = vsub.f32 1.5, %v2026
          %v2028 = vmul.f32 %v2023, %v2027
          %vm2029 = vweird.f32 %v2019
          %vm2030 = vweird.f32 %v2023
          %vm2031 = vmor %vm2029, %vm2030
          %v2032 = vsel %vm2031, %v2023, %v2028
          %v2033 = vrsqrt.pop %v2020
          %v2034 = vmul.f32 %v2033, %v2020
          %v2035 = vmul.f32 %v2034, %v2033
          %v2036 = vmul.f32 0.5, %v2035
          %v2037 = vsub.f32 1.5, %v2036
          %v2038 = vmul.f32 %v2033, %v2037
          %vm2039 = vweird.f32 %v2020
          %vm2040 = vweird.f32 %v2033
          %vm2041 = vmor %vm2039, %vm2040
          %v2042 = vsel %vm2041, %v2033, %v2038
          %v2043 = vrsqrt.pop %v2021
          %v2044 = vmul.f32 %v2043, %v2021
          %v2045 = vmul.f32 %v2044, %v2043
          %v2046 = vmul.f32 0.5, %v2045
          %v2047 = vsub.f32 1.5, %v2046
          %v2048 = vmul.f32 %v2043, %v2047
          %vm2049 = vweird.f32 %v2021
          %vm2050 = vweird.f32 %v2043
          %vm2051 = vmor %vm2049, %vm2050
          %v2052 = vsel %vm2051, %v2043, %v2048
          %v2053 = vrsqrt.pop %v2022
          %v2054 = vmul.f32 %v2053, %v2022
          %v2055 = vmul.f32 %v2054, %v2053
          %v2056 = vmul.f32 0.5, %v2055
          %v2057 = vsub.f32 1.5, %v2056
          %v2058 = vmul.f32 %v2053, %v2057
          %vm2059 = vweird.f32 %v2022
          %vm2060 = vweird.f32 %v2053
          %vm2061 = vmor %vm2059, %vm2060
          %v2062 = vsel %vm2061, %v2053, %v2058
          %v2063 = vmul.f32 %v1995, %v2032
          %v2064 = vmul.f32 %v1996, %v2042
          %v2065 = vmul.f32 %v1997, %v2052
          %v2066 = vmul.f32 %v1998, %v2062
          %v2068 = vperm.slane %v1977, 0
          %v2070 = vmul.f32 %v2063, %v2068
          %v2071 = vmul.f32 %v2064, %v2068
          %v2072 = vmul.f32 %v2065, %v2068
          %v2073 = vmul.f32 %v2066, %v2068
          %v2075 = vperm.slane %v1978, 0
          %v2077 = vadd.f32 %v2070, %v2075
          %v2078 = vadd.f32 %v2071, %v2075
          %v2079 = vadd.f32 %v2072, %v2075
          %v2080 = vadd.f32 %v2073, %v2075
          %v2081 = vsel %vm672, %v2077, 0.0
          %v2082 = vsel %vm672, %v2078, 0.0
          %v2083 = vadd.f32 %v2081, %v2082
          %v2084 = vrot.slane %v2083, 4
          %v2085 = vadd.f32 %v2083, %v2084
          %v2086 = vrot.slane %v2085, 2
          %v2087 = vadd.f32 %v2085, %v2086
          %v2088 = vrot.slane %v2087, 1
          %v2089 = vadd.f32 %v2087, %v2088
          %v2090 = vsel %vm672, %v2079, 0.0
          %v2091 = vsel %vm672, %v2080, 0.0
          %v2092 = vadd.f32 %v2090, %v2091
          %v2093 = vrot.slane %v2092, 4
          %v2094 = vadd.f32 %v2092, %v2093
          %v2095 = vrot.slane %v2094, 2
          %v2096 = vadd.f32 %v2094, %v2095
          %v2097 = vrot.slane %v2096, 1
          %v2098 = vadd.f32 %v2096, %v2097
          %v2099 = vrcp.pop 16.0
          %v2100 = vmul.f32 16.0, %v2099
          %v2101 = vsub.f32 1.0, %v2100
          %v2102 = vmul.f32 %v2099, %v2101
          %v2103 = vadd.f32 %v2099, %v2102
          %vm2104 = vweird.f32 %v2099
          %v2105 = vsel %vm2104, %v2099, %v2103
          %v2106 = vmul.f32 %v2089, %v2105
          %v2107 = vmul.f32 %v2098, %v2105
          %vm2110 = vcmask 1041409
          %v2111 = vsel %vm2110, %v2107, %v2106
          %vm2113 = vcmask 254976
          %2114 = vst.msk [vmem:[#allocation3] sm:$0x3] %vm2113, %v2111
        $region100: #{joint_transformer_forward.1} parent=91 // pred_fallthru
          _
        // Predicated region
        $region101: #{joint_transformer_forward.1} parent=91 // pred_check
          %p2115 = pneg %p421
        $region102: #{joint_transformer_forward.1} parent=91 // pred_check_branch
          %2117 = sbr.rel (%p2115) target = $region104
        $region103: #{joint_transformer_forward.1} parent=91 // pred_region
          %2119 = vsyncadd [#allocation4], 0
          %s2121 = sshll.u32 [#allocation3], 4
          %s2122 = int_to_ptr.vmem [resolvable:$true] %s2121
          %s2123 = sshll.u32 %s18, 4
          %s2124 = int_to_ptr.hbm [resolvable:$true] %s2123
          %2126 = dma.vmem_to_hbm [thread:$0]  %s2122, 32, %s2124, [#allocation4]
        $region104: #{joint_transformer_forward.1} parent=91 // pred_fallthru
          _
        // Predicated region
        $region105: #{joint_transformer_forward.1} parent=91 // pred_check
          %p2127 = pneg %p421
        $region106: #{joint_transformer_forward.1} parent=91 // pred_check_branch
          %2129 = sbr.rel (%p2127) target = $region108
        $region107: #{joint_transformer_forward.1} parent=91 // pred_region
          %2131 = dma.done [#allocation4], 32
        $region108: #{joint_transformer_forward.1} parent=91 // pred_fallthru
          _
      $region92: #{joint_transformer_forward.1} parent=5 // pred_fallthru
        _
      %p2132 = scmp.le.s32.totalorder 2, %s25
      // Predicated region
      $region109: #{joint_transformer_forward.1} parent=5 // pred_check
        %p2133 = pneg %p2132
      $region110: #{joint_transformer_forward.1} parent=5 // pred_check_branch
        %2135 = sbr.rel (%p2133) target = $region112
      $region111: #{joint_transformer_forward.1} parent=5 // pred_region
        %s2136 = ssub.s32 %s25, 2
      $region112: #{joint_transformer_forward.1} parent=5 // pred_fallthru
        _
    $region6: #{joint_transformer_forward.1} parent=1 // loop_footer
      %s29 = sadd.s32 1, %s25
    $region7: #{joint_transformer_forward.1} parent=1 // loop_footer_branch
      %24 = sbr.rel target = $region3
    $region8: #{joint_transformer_forward.1} parent=1 // loop_exit
      _
    %2137 = vsyncpa [#allocation4], 1
    %s2138 = scalar_lea.sflag [#allocation4], 1
    %2139 = vsyncpa %s2138, 1

</llo_original>
